<compile_context>
chip_gen: v6e
topology: v6e:2x2x1
jax: 0.10.0
libtpu: 0.0.40
codegen_flags: <defaults>
</compile_context>

<pallas_src>
import functools
import math

import jax
import jax.numpy as jnp
from jax import lax
from jax.experimental import pallas as pl
from jax.experimental.pallas import tpu as pltpu

_LN_EPS = 1e-5
# Scoped VMEM limit: ~16 MiB headroom under v7x's 64 MiB; also fine on v5e/v6e.
_VMEM_LIMIT = 48 * 1024 * 1024


def _layer_norm_f32(y, gamma, beta, eps=_LN_EPS):
    mu = jnp.mean(y, axis=-1, keepdims=True)
    var = jnp.mean(jnp.square(y - mu), axis=-1, keepdims=True)
    return (y - mu) * lax.rsqrt(var + eps) * gamma + beta


# ---------------------------------------------------------------------------
# Kernel A: multi-head attention + residual + LayerNorm
#   grid = (batch, q_tiles, heads); heads is the accumulation axis.
# ---------------------------------------------------------------------------
def _mha_ln_kernel(xq_ref, xkv_ref, bias_ref,
                   wq_ref, wk_ref, wv_ref, bq_ref, bk_ref, bv_ref,
                   wo_ref, bo_ref, gamma_ref, beta_ref,
                   o_ref, acc_ref, *, scale):
    f32 = jnp.float32
    h = pl.program_id(2)

    @pl.when(h == 0)
    def _init():
        acc_ref[...] = jnp.zeros_like(acc_ref)

    xq = xq_ref[...]                      # (tq, D) in the operand dtype
    xkv = xkv_ref[...]                    # (Skv, D)
    dt = xq.dtype

    # Per-head projections: operands stay in the input dtype, the MXU
    # accumulates in f32.  wq_ref[h] is a dynamic first-axis slice of the
    # resident (H, D, dh) weight, so no lane slicing happens in-kernel.
    q = (jnp.dot(xq, wq_ref[h], preferred_element_type=f32)
         + bq_ref[h].astype(f32)) * scale                      # scale folded into q
    k = jnp.dot(xkv, wk_ref[h], preferred_element_type=f32) + bk_ref[h].astype(f32)
    v = jnp.dot(xkv, wv_ref[h], preferred_element_type=f32) + bv_ref[h].astype(f32)
    q = q.astype(dt)
    k = k.astype(dt)
    v = v.astype(dt)

    # Q @ K^T in NT form (contract last dims) - no materialized transpose.
    s = lax.dot_general(q, k, (((1,), (1,)), ((), ())),
                        preferred_element_type=f32)            # (tq, Skv) f32
    s = s + bias_ref[...].astype(f32)                          # additive mask bias (f32)

    # Softmax statistics in f32; reciprocal goes to the EUP slot.
    m = jnp.max(s, axis=-1, keepdims=True)
    p = jnp.exp(s - m)
    l = jnp.sum(p, axis=-1, keepdims=True)
    p = p * pl.reciprocal(l, approx=True)

    ctx = jnp.dot(p.astype(dt), v, preferred_element_type=f32)  # (tq, dh)
    # Output projection for this head, accumulated over heads in f32 VMEM.
    acc_ref[...] += jnp.dot(ctx.astype(dt), wo_ref[h], preferred_element_type=f32)

    @pl.when(h == pl.num_programs(2) - 1)
    def _finalize():
        attn = acc_ref[...] + bo_ref[...].astype(f32)
        # dropout == identity in eval mode; residual + LayerNorm fused (f32).
        y = _layer_norm_f32(xq.astype(f32) + attn,
                            gamma_ref[...].astype(f32), beta_ref[...].astype(f32))
        o_ref[...] = y.astype(o_ref.dtype)


def _mha_ln_call(xq, xkv, bias, attn_p, ln_p, num_heads, q_tile=256):
    """xq: (Sq, B, D), xkv: (Skv, B, D) in the native seq-first layout."""
    Sq, B, D = xq.shape
    Skv = xkv.shape[0]
    H = num_heads
    assert D % H == 0
    dh = D // H
    scale = 1.0 / math.sqrt(dh)

    tq = Sq if Sq <= q_tile else q_tile
    n_q = pl.cdiv(Sq, tq)

    # Free reshapes: (S, B, D) -> (S, B*D); column block b is batch b.
    # Lets the kernel read lane-dense (tq, D) / (Skv, D) slabs with no
    # activation transposes anywhere in the layer.
    xq2 = xq.reshape(Sq, B * D)
    xkv2 = xkv.reshape(Skv, B * D)

    # One-time per-head weight layout (H, D, dh) so the kernel never slices
    # lanes: head split of the projection output features / wo input features.
    def heads_out(w):   # (D, D) -> (H, D, dh)
        return jnp.transpose(w.reshape(D, H, dh), (1, 0, 2))

    def heads_bias(b):  # (1, D) -> (H, 1, dh)
        return jnp.transpose(b.reshape(1, H, dh), (1, 0, 2))

    wq_h = heads_out(attn_p["wq"])
    wk_h = heads_out(attn_p["wk"])
    wv_h = heads_out(attn_p["wv"])
    bq_h = heads_bias(attn_p["bq"])
    bk_h = heads_bias(attn_p["bk"])
    bv_h = heads_bias(attn_p["bv"])
    wo_h = attn_p["wo"].reshape(H, dh, D)

    Bb, Rb, _ = bias.shape              # Bb in {1, B}; Rb in {1, Sq}
    bias_rows = 1 if Rb == 1 else tq
    if Bb == 1 and Rb == 1:
        bias_idx = lambda b, q, h: (0, 0, 0)
    elif Bb == 1:
        bias_idx = lambda b, q, h: (0, q, 0)
    elif Rb == 1:
        bias_idx = lambda b, q, h: (b, 0, 0)
    else:
        bias_idx = lambda b, q, h: (b, q, 0)

    const3 = lambda b, q, h: (0, 0, 0)
    const2 = lambda b, q, h: (0, 0)
    kernel = functools.partial(_mha_ln_kernel, scale=scale)

    out2 = pl.pallas_call(
        kernel,
        out_shape=jax.ShapeDtypeStruct((Sq, B * D), xq.dtype),
        grid=(B, n_q, H),
        in_specs=[
            pl.BlockSpec((tq, D), lambda b, q, h: (q, b)),      # query rows (strided DMA)
            pl.BlockSpec((Skv, D), lambda b, q, h: (0, b)),     # key/value source
            pl.BlockSpec((None, bias_rows, Skv), bias_idx),     # additive attention bias
            pl.BlockSpec((H, D, dh), const3),   # wq (per-head layout, resident)
            pl.BlockSpec((H, D, dh), const3),   # wk
            pl.BlockSpec((H, D, dh), const3),   # wv
            pl.BlockSpec((H, 1, dh), const3),   # bq
            pl.BlockSpec((H, 1, dh), const3),   # bk
            pl.BlockSpec((H, 1, dh), const3),   # bv
            pl.BlockSpec((H, dh, D), const3),   # wo
            pl.BlockSpec((1, D), const2),       # bo
            pl.BlockSpec((1, D), const2),       # ln gamma
            pl.BlockSpec((1, D), const2),       # ln beta
        ],
        out_specs=pl.BlockSpec((tq, D), lambda b, q, h: (q, b)),
        scratch_shapes=[pltpu.VMEM((tq, D), jnp.float32)],      # head-sum accumulator
        compiler_params=pltpu.CompilerParams(
            dimension_semantics=("parallel", "parallel", "arbitrary"),
            vmem_limit_bytes=_VMEM_LIMIT),
    )(xq2, xkv2, bias,
      wq_h, wk_h, wv_h, bq_h, bk_h, bv_h, wo_h,
      attn_p["bo"], ln_p["gamma"], ln_p["beta"])
    return out2.reshape(Sq, B, D)


# ---------------------------------------------------------------------------
# Kernel B: FFN (Linear -> ReLU -> Linear) + residual + LayerNorm
#   grid = (row_tiles, d_ff tiles); d_ff is the accumulation axis.
# ---------------------------------------------------------------------------
def _ffn_ln_kernel(x_ref, w1_ref, b1_ref, w2_ref, b2_ref, gamma_ref, beta_ref,
                   o_ref, acc_ref):
    f32 = jnp.float32
    f = pl.program_id(1)

    @pl.when(f == 0)
    def _init():
        acc_ref[...] = jnp.zeros_like(acc_ref)

    x = x_ref[...]                                              # (tr, D) operand dtype
    hdn = jnp.dot(x, w1_ref[...], preferred_element_type=f32) + b1_ref[...].astype(f32)
    hdn = jnp.maximum(hdn, 0.0).astype(x.dtype)                 # ReLU (elementwise per F tile)
    acc_ref[...] += jnp.dot(hdn, w2_ref[...], preferred_element_type=f32)

    @pl.when(f == pl.num_programs(1) - 1)
    def _finalize():
        y = acc_ref[...] + b2_ref[...].astype(f32)
        y = _layer_norm_f32(x.astype(f32) + y,
                            gamma_ref[...].astype(f32), beta_ref[...].astype(f32))
        o_ref[...] = y.astype(o_ref.dtype)


def _ffn_ln_call(x2d, ffn_p, ln_p, row_tile=512, f_tile=1024):
    N, D = x2d.shape
    F = ffn_p["w1"].shape[1]
    tr = N if N <= row_tile else row_tile
    tf = F if F <= f_tile else f_tile
    if F % tf != 0:
        tf = F        # keep the d_ff reduction un-tiled if it doesn't divide evenly
    grid = (pl.cdiv(N, tr), F // tf)
    const2 = lambda r, f: (0, 0)
    return pl.pallas_call(
        _ffn_ln_kernel,
        out_shape=jax.ShapeDtypeStruct((N, D), x2d.dtype),
        grid=grid,
        in_specs=[
            pl.BlockSpec((tr, D), lambda r, f: (r, 0)),   # activation rows (revisited over f)
            pl.BlockSpec((D, tf), lambda r, f: (0, f)),   # w1 column block
            pl.BlockSpec((1, tf), lambda r, f: (0, f)),   # b1 block
            pl.BlockSpec((tf, D), lambda r, f: (f, 0)),   # w2 row block
            pl.BlockSpec((1, D), const2),                 # b2
            pl.BlockSpec((1, D), const2),                 # ln gamma
            pl.BlockSpec((1, D), const2),                 # ln beta
        ],
        out_specs=pl.BlockSpec((tr, D), lambda r, f: (r, 0)),
        scratch_shapes=[pltpu.VMEM((tr, D), jnp.float32)],
        compiler_params=pltpu.CompilerParams(
            dimension_semantics=("parallel", "arbitrary"),
            vmem_limit_bytes=_VMEM_LIMIT),
    )(x2d, ffn_p["w1"], ffn_p["b1"], ffn_p["w2"], ffn_p["b2"],
      ln_p["gamma"], ln_p["beta"])


# ---------------------------------------------------------------------------
# Attention-bias helpers (shared by the Pallas path and the pure-JAX reference)
# ---------------------------------------------------------------------------
def _build_self_bias(tgt_mask, sq, skv):
    """Additive bias from attn_mask; shape (1, R, skv) with R in {1, sq}."""
    if tgt_mask is None:
        return jnp.zeros((1, 1, skv), jnp.float32)
    m = jnp.asarray(tgt_mask)
    if m.dtype == jnp.bool_:                        # True = masked out
        m = jnp.where(m, jnp.float32(-1e9), jnp.float32(0.0))
    return m.astype(jnp.float32).reshape(1, sq, skv)


def _build_cross_bias(key_padding_mask, skv):
    """Additive bias from key_padding_mask (True = pad); shape (B or 1, 1, skv)."""
    if key_padding_mask is None:
        return jnp.zeros((1, 1, skv), jnp.float32)
    m = jnp.asarray(key_padding_mask)
    if m.dtype == jnp.bool_:
        m = jnp.where(m, jnp.float32(-1e9), jnp.float32(0.0))
    return m.astype(jnp.float32)[:, None, :]


# ---------------------------------------------------------------------------
# Full DecoderLayer forward (Pallas)
# ---------------------------------------------------------------------------
def decoder_layer_forward(x, memory, params, num_heads, tgt_mask=None, memory_mask=None,
                          *, q_tile=256, row_tile=512, f_tile=1024):
    """x: (S, B, D) seq-first (PyTorch layout); memory: (Sm, B, D).

    Tile defaults target v5e/v6e; halve q_tile/row_tile on v7x (64 MiB VMEM).
    """
    S, B, D = x.shape
    Sm = memory.shape[0]

    # Self-attention block (attn + residual + LayerNorm fused in one kernel).
    self_bias = _build_self_bias(tgt_mask, S, S)
    x1 = _mha_ln_call(x, x, self_bias, params["self_attn"], params["ln1"],
                      num_heads, q_tile)

    # Cross-attention block (queries from x1, keys/values from memory).
    cross_bias = _build_cross_bias(memory_mask, Sm)
    x2 = _mha_ln_call(x1, memory, cross_bias, params["cross_attn"], params["ln2"],
                      num_heads, q_tile)

    # Feed-forward block on the lane-dense flattened (S*B, D) slab (free reshape).
    x3 = _ffn_ln_call(x2.reshape(S * B, D), params["ffn"], params["ln3"],
                      row_tile, f_tile)
    return x3.reshape(S, B, D)


# ---------------------------------------------------------------------------
# Parameter init (equivalent of DecoderLayer.__init__)
# ---------------------------------------------------------------------------
def init_decoder_layer_params(key, d_model, d_ff, dtype=jnp.float32):
    ks = jax.random.split(key, 6)

    def dense(k, fan_in, shape):
        return (jax.random.normal(k, shape, jnp.float32) / math.sqrt(fan_in)).astype(dtype)

    def attn_params(k):
        kk = jax.random.split(k, 8)
        return dict(
            wq=dense(kk[0], d_model, (d_model, d_model)),
            wk=dense(kk[1], d_model, (d_model, d_model)),
            wv=dense(kk[2], d_model, (d_model, d_model)),
            wo=dense(kk[3], d_model, (d_model, d_model)),
            bq=0.02 * dense(kk[4], 1, (1, d_model)),
            bk=0.02 * dense(kk[5], 1, (1, d_model)),
            bv=0.02 * dense(kk[6], 1, (1, d_model)),
            bo=0.02 * dense(kk[7], 1, (1, d_model)),
        )

    def ln_params(k):
        k1, k2 = jax.random.split(k)
        return dict(
            gamma=(1.0 + 0.1 * jax.random.normal(k1, (1, d_model), jnp.float32)).astype(dtype),
            beta=(0.1 * jax.random.normal(k2, (1, d_model), jnp.float32)).astype(dtype),
        )

    kf1, kf2, kf3, kf4 = jax.random.split(ks[2], 4)
    return dict(
        self_attn=attn_params(ks[0]),
        cross_attn=attn_params(ks[1]),
        ffn=dict(
            w1=dense(kf1, d_model, (d_model, d_ff)),
            b1=0.02 * dense(kf2, 1, (1, d_ff)),
            w2=dense(kf3, d_ff, (d_ff, d_model)),
            b2=0.02 * dense(kf4, 1, (1, d_model)),
        ),
        ln1=ln_params(ks[3]),
        ln2=ln_params(ks[4]),
        ln3=ln_params(ks[5]),
    )


# ---------------------------------------------------------------------------
# Pure-JAX reference (mirrors the PyTorch forward in eval mode)
# ---------------------------------------------------------------------------
def decoder_layer_ref(x, memory, params, num_heads, tgt_mask=None, memory_mask=None):
    S, B, D = x.shape
    Sm = memory.shape[0]
    dh = D // num_heads
    scale = 1.0 / math.sqrt(dh)

    def mha(xq, xkv, p, bias):
        Sq = xq.shape[0]
        Skv = xkv.shape[0]
        q = xq @ p["wq"] + p["bq"]
        k = xkv @ p["wk"] + p["bk"]
        v = xkv @ p["wv"] + p["bv"]
        qh = q.reshape(Sq, B, num_heads, dh).transpose(1, 2, 0, 3)
        kh = k.reshape(Skv, B, num_heads, dh).transpose(1, 2, 0, 3)
        vh = v.reshape(Skv, B, num_heads, dh).transpose(1, 2, 0, 3)
        s = jnp.einsum("bhqd,bhkd->bhqk", qh, kh) * scale + bias[:, None]
        a = jax.nn.softmax(s, axis=-1)
        ctx = jnp.einsum("bhqk,bhkd->bhqd", a, vh)
        ctx = ctx.transpose(2, 0, 1, 3).reshape(Sq, B, D)
        return ctx @ p["wo"] + p["bo"]

    def ln(y, p):
        return _layer_norm_f32(y, p["gamma"], p["beta"])

    x1 = ln(x + mha(x, x, params["self_attn"], _build_self_bias(tgt_mask, S, S)), params["ln1"])
    x2 = ln(x1 + mha(x1, memory, params["cross_attn"], _build_cross_bias(memory_mask, Sm)), params["ln2"])
    h = jnp.maximum(x2 @ params["ffn"]["w1"] + params["ffn"]["b1"], 0.0)
    ff = h @ params["ffn"]["w2"] + params["ffn"]["b2"]
    return ln(x2 + ff, params["ln3"])


if __name__ == "__main__":
    SEQ, MEM_SEQ, BATCH, D_MODEL, NUM_HEADS, D_FF = 16, 16, 2, 128, 4, 512

    key = jax.random.PRNGKey(0)
    kx, km, kp = jax.random.split(key, 3)
    x = jax.random.normal(kx, (SEQ, BATCH, D_MODEL), jnp.float32)
    memory = jax.random.normal(km, (MEM_SEQ, BATCH, D_MODEL), jnp.float32)
    params = init_decoder_layer_params(kp, D_MODEL, D_FF)

    # Causal target mask (additive float, PyTorch-style) and a key-padding mask
    # that pads the last memory position of batch element 1 (exercises both
    # bias paths of the attention kernel).
    tgt_mask = jnp.where(jnp.triu(jnp.ones((SEQ, SEQ), jnp.bool_), k=1),
                         -1e9, 0.0).astype(jnp.float32)
    memory_mask = jnp.zeros((BATCH, MEM_SEQ), jnp.bool_).at[1, MEM_SEQ - 1].set(True)

    # Small tiles so the test exercises the q-tile axis and the d_ff reduction
    # axis (2 q tiles, 2 row tiles, 2 d_ff tiles) at these toy shapes.
    out = decoder_layer_forward(x, memory, params, NUM_HEADS, tgt_mask, memory_mask,
                                q_tile=8, row_tile=16, f_tile=256)
    out = jax.block_until_ready(out)

    # Accurate f32 reference (kernel matmuls use TPU default MXU precision).
    with jax.default_matmul_precision("float32"):
        ref = decoder_layer_ref(x, memory, params, NUM_HEADS, tgt_mask, memory_mask)
        ref = jax.block_until_ready(ref)

    assert out.shape == (SEQ, BATCH, D_MODEL)
    assert out.dtype == jnp.float32
    err = float(jnp.max(jnp.abs(out - ref)))
    # Tolerance accounts for MXU default-precision accumulation and the
    # approximate (EUP) reciprocal in the softmax normalization.
    assert err < 3e-2, f"Pallas output mismatch vs reference: max abs err = {err}"
    print("KERNEL_OK")
</pallas_src>

<mosaic_0001>
module attributes {stable_mosaic.version = 11 : i64} {
  func.func @_mha_ln_kernel(%arg0: i32, %arg1: i32, %arg2: i32, %arg3: memref<8x128xf32, #tpu.memory_space<vmem>>, %arg4: memref<16x128xf32, #tpu.memory_space<vmem>>, %arg5: memref<1x8x16xf32, #tpu.memory_space<vmem>>, %arg6: memref<4x128x32xf32, #tpu.memory_space<vmem>>, %arg7: memref<4x128x32xf32, #tpu.memory_space<vmem>>, %arg8: memref<4x128x32xf32, #tpu.memory_space<vmem>>, %arg9: memref<4x1x32xf32, #tpu.memory_space<vmem>>, %arg10: memref<4x1x32xf32, #tpu.memory_space<vmem>>, %arg11: memref<4x1x32xf32, #tpu.memory_space<vmem>>, %arg12: memref<4x32x128xf32, #tpu.memory_space<vmem>>, %arg13: memref<1x128xf32, #tpu.memory_space<vmem>>, %arg14: memref<1x128xf32, #tpu.memory_space<vmem>>, %arg15: memref<1x128xf32, #tpu.memory_space<vmem>>, %arg16: memref<8x128xf32, #tpu.memory_space<vmem>>, %arg17: memref<8x128xf32, #tpu.memory_space<vmem>>) attributes {dimension_semantics = [#tpu.dimension_semantics<parallel>, #tpu.dimension_semantics<parallel>, #tpu.dimension_semantics<arbitrary>], iteration_bounds = array<i64: 2, 2, 4>, scalar_prefetch = 0 : i64, scratch_operands = 1 : i64, tpu.core_type = #tpu.core_type<tc>, window_params = [{transform_indices = @transform_0, window_bounds = array<i64: 8, 128>}, {transform_indices = @transform_1, window_bounds = array<i64: 16, 128>}, {transform_indices = @transform_2, window_bounds = array<i64: 1, 8, 16>}, {pipeline_mode = #tpu.pipeline_mode<synchronous>, transform_indices = @transform_3, window_bounds = array<i64: 4, 128, 32>}, {pipeline_mode = #tpu.pipeline_mode<synchronous>, transform_indices = @transform_4, window_bounds = array<i64: 4, 128, 32>}, {pipeline_mode = #tpu.pipeline_mode<synchronous>, transform_indices = @transform_5, window_bounds = array<i64: 4, 128, 32>}, {pipeline_mode = #tpu.pipeline_mode<synchronous>, transform_indices = @transform_6, window_bounds = array<i64: 4, 1, 32>}, {pipeline_mode = #tpu.pipeline_mode<synchronous>, transform_indices = @transform_7, window_bounds = array<i64: 4, 1, 32>}, {pipeline_mode = #tpu.pipeline_mode<synchronous>, transform_indices = @transform_8, window_bounds = array<i64: 4, 1, 32>}, {pipeline_mode = #tpu.pipeline_mode<synchronous>, transform_indices = @transform_9, window_bounds = array<i64: 4, 32, 128>}, {pipeline_mode = #tpu.pipeline_mode<synchronous>, transform_indices = @transform_10, window_bounds = array<i64: 1, 128>}, {pipeline_mode = #tpu.pipeline_mode<synchronous>, transform_indices = @transform_11, window_bounds = array<i64: 1, 128>}, {pipeline_mode = #tpu.pipeline_mode<synchronous>, transform_indices = @transform_12, window_bounds = array<i64: 1, 128>}, {transform_indices = @transform_13, window_bounds = array<i64: 8, 128>}]} {
    %c0_i32 = arith.constant 0 : i32
    %0 = arith.cmpi eq, %arg2, %c0_i32 : i32
    %1 = arith.extui %0 : i1 to i32
    %c0_i32_0 = arith.constant 0 : i32
    %2 = arith.cmpi ne, %1, %c0_i32_0 : i32
    scf.if %2 {
      %cst_34 = arith.constant 0.000000e+00 : f32
      %59 = vector.broadcast %cst_34 : f32 to vector<8x128xf32>
      %c0_35 = arith.constant 0 : index
      %c0_36 = arith.constant 0 : index
      %60 = vector.load %arg17[%c0_35, %c0_36] : memref<8x128xf32, #tpu.memory_space<vmem>>, vector<8x128xf32>
      tpu.vector_store %arg17[%c0_35, %c0_36], %59 {strides = array<i32>} : memref<8x128xf32, #tpu.memory_space<vmem>>, vector<8x128xf32>,
    } else {
    }
    %c0 = arith.constant 0 : index
    %c0_1 = arith.constant 0 : index
    %3 = vector.load %arg3[%c0, %c0_1] : memref<8x128xf32, #tpu.memory_space<vmem>>, vector<8x128xf32>
    %c0_2 = arith.constant 0 : index
    %c0_3 = arith.constant 0 : index
    %4 = vector.load %arg4[%c0_2, %c0_3] : memref<16x128xf32, #tpu.memory_space<vmem>>, vector<16x128xf32>
    %5 = arith.index_cast %arg2 : i32 to index
    %c0_4 = arith.constant 0 : index
    %c0_5 = arith.constant 0 : index
    %6 = vector.load %arg6[%5, %c0_4, %c0_5] : memref<4x128x32xf32, #tpu.memory_space<vmem>>, vector<1x128x32xf32>
    %7 = vector.shape_cast %6 : vector<1x128x32xf32> to vector<128x32xf32>
    %cst = arith.constant dense<0.000000e+00> : vector<8x32xf32>
    %8 = tpu.matmul %3, %7, %cst {dimension_numbers = #tpu.dot_dimension_numbers<[1], [0], [0], [1], [0, 0, 1, 1], [], []>} : vector<8x128xf32>, vector<128x32xf32>, vector<8x32xf32> -> vector<8x32xf32>
    %9 = arith.index_cast %arg2 : i32 to index
    %c0_6 = arith.constant 0 : index
    %c0_7 = arith.constant 0 : index
    %10 = vector.load %arg9[%9, %c0_6, %c0_7] : memref<4x1x32xf32, #tpu.memory_space<vmem>>, vector<1x1x32xf32>
    %11 = vector.shape_cast %10 : vector<1x1x32xf32> to vector<1x32xf32>
    %12 = vector.broadcast %11 : vector<1x32xf32> to vector<8x32xf32>
    %13 = arith.addf %8, %12 : vector<8x32xf32>
    %cst_8 = arith.constant 0.176776692 : f32
    %14 = vector.broadcast %cst_8 : f32 to vector<8x32xf32>
    %15 = arith.mulf %13, %14 : vector<8x32xf32>
    %16 = arith.index_cast %arg2 : i32 to index
    %c0_9 = arith.constant 0 : index
    %c0_10 = arith.constant 0 : index
    %17 = vector.load %arg7[%16, %c0_9, %c0_10] : memref<4x128x32xf32, #tpu.memory_space<vmem>>, vector<1x128x32xf32>
    %18 = vector.shape_cast %17 : vector<1x128x32xf32> to vector<128x32xf32>
    %cst_11 = arith.constant dense<0.000000e+00> : vector<16x32xf32>
    %19 = tpu.matmul %4, %18, %cst_11 {dimension_numbers = #tpu.dot_dimension_numbers<[1], [0], [0], [1], [0, 0, 1, 1], [], []>} : vector<16x128xf32>, vector<128x32xf32>, vector<16x32xf32> -> vector<16x32xf32>
    %20 = arith.index_cast %arg2 : i32 to index
    %c0_12 = arith.constant 0 : index
    %c0_13 = arith.constant 0 : index
    %21 = vector.load %arg10[%20, %c0_12, %c0_13] : memref<4x1x32xf32, #tpu.memory_space<vmem>>, vector<1x1x32xf32>
    %22 = vector.shape_cast %21 : vector<1x1x32xf32> to vector<1x32xf32>
    %23 = vector.broadcast %22 : vector<1x32xf32> to vector<16x32xf32>
    %24 = arith.addf %19, %23 : vector<16x32xf32>
    %25 = arith.index_cast %arg2 : i32 to index
    %c0_14 = arith.constant 0 : index
    %c0_15 = arith.constant 0 : index
    %26 = vector.load %arg8[%25, %c0_14, %c0_15] : memref<4x128x32xf32, #tpu.memory_space<vmem>>, vector<1x128x32xf32>
    %27 = vector.shape_cast %26 : vector<1x128x32xf32> to vector<128x32xf32>
    %cst_16 = arith.constant dense<0.000000e+00> : vector<16x32xf32>
    %28 = tpu.matmul %4, %27, %cst_16 {dimension_numbers = #tpu.dot_dimension_numbers<[1], [0], [0], [1], [0, 0, 1, 1], [], []>} : vector<16x128xf32>, vector<128x32xf32>, vector<16x32xf32> -> vector<16x32xf32>
    %29 = arith.index_cast %arg2 : i32 to index
    %c0_17 = arith.constant 0 : index
    %c0_18 = arith.constant 0 : index
    %30 = vector.load %arg11[%29, %c0_17, %c0_18] : memref<4x1x32xf32, #tpu.memory_space<vmem>>, vector<1x1x32xf32>
    %31 = vector.shape_cast %30 : vector<1x1x32xf32> to vector<1x32xf32>
    %32 = vector.broadcast %31 : vector<1x32xf32> to vector<16x32xf32>
    %33 = arith.addf %28, %32 : vector<16x32xf32>
    %cst_19 = arith.constant dense<0.000000e+00> : vector<8x16xf32>
    %34 = tpu.matmul %15, %24, %cst_19 {dimension_numbers = #tpu.dot_dimension_numbers<[1], [1], [0], [0], [0, 0, 1, 0], [], []>} : vector<8x32xf32>, vector<16x32xf32>, vector<8x16xf32> -> vector<8x16xf32>
    %c0_20 = arith.constant 0 : index
    %c0_21 = arith.constant 0 : index
    %c0_22 = arith.constant 0 : index
    %35 = vector.load %arg5[%c0_20, %c0_21, %c0_22] : memref<1x8x16xf32, #tpu.memory_space<vmem>>, vector<1x8x16xf32>
    %36 = vector.shape_cast %35 : vector<1x8x16xf32> to vector<8x16xf32>
    %37 = arith.addf %34, %36 : vector<8x16xf32>
    %cst_23 = arith.constant dense<0xFF800000> : vector<8xf32>
    %38 = vector.multi_reduction <maximumf>, %37, %cst_23 [1] : vector<8x16xf32> to vector<8xf32>
    %39 = vector.shape_cast %38 : vector<8xf32> to vector<8x1xf32>
    %40 = vector.broadcast %39 : vector<8x1xf32> to vector<8x16xf32>
    %41 = arith.subf %37, %40 : vector<8x16xf32>
    %42 = math.exp %41 : vector<8x16xf32>
    %cst_24 = arith.constant dense<0.000000e+00> : vector<8xf32>
    %43 = vector.multi_reduction <add>, %42, %cst_24 [1] : vector<8x16xf32> to vector<8xf32>
    %44 = vector.shape_cast %43 : vector<8xf32> to vector<8x1xf32>
    %45 = tpu.reciprocal %44 {approx = true} : vector<8x1xf32> -> vector<8x1xf32>
    %46 = vector.broadcast %45 : vector<8x1xf32> to vector<8x16xf32>
    %47 = arith.mulf %42, %46 : vector<8x16xf32>
    %cst_25 = arith.constant dense<0.000000e+00> : vector<8x32xf32>
    %48 = tpu.matmul %47, %33, %cst_25 {dimension_numbers = #tpu.dot_dimension_numbers<[1], [0], [0], [1], [0, 0, 1, 1], [], []>} : vector<8x16xf32>, vector<16x32xf32>, vector<8x32xf32> -> vector<8x32xf32>
    %c0_26 = arith.constant 0 : index
    %c0_27 = arith.constant 0 : index
    %49 = vector.load %arg17[%c0_26, %c0_27] : memref<8x128xf32, #tpu.memory_space<vmem>>, vector<8x128xf32>
    %50 = arith.index_cast %arg2 : i32 to index
    %c0_28 = arith.constant 0 : index
    %c0_29 = arith.constant 0 : index
    %51 = vector.load %arg12[%50, %c0_28, %c0_29] : memref<4x32x128xf32, #tpu.memory_space<vmem>>, vector<1x32x128xf32>
    %52 = vector.shape_cast %51 : vector<1x32x128xf32> to vector<32x128xf32>
    %cst_30 = arith.constant dense<0.000000e+00> : vector<8x128xf32>
    %53 = tpu.matmul %48, %52, %cst_30 {dimension_numbers = #tpu.dot_dimension_numbers<[1], [0], [0], [1], [0, 0, 1, 1], [], []>} : vector<8x32xf32>, vector<32x128xf32>, vector<8x128xf32> -> vector<8x128xf32>
    %54 = arith.addf %49, %53 : vector<8x128xf32>
    %c0_31 = arith.constant 0 : index
    %c0_32 = arith.constant 0 : index
    %55 = vector.load %arg17[%c0_31, %c0_32] : memref<8x128xf32, #tpu.memory_space<vmem>>, vector<8x128xf32>
    tpu.vector_store %arg17[%c0_31, %c0_32], %54 {strides = array<i32>} : memref<8x128xf32, #tpu.memory_space<vmem>>, vector<8x128xf32>,
    %c3_i32 = arith.constant 3 : i32
    %56 = arith.cmpi eq, %arg2, %c3_i32 : i32
    %57 = arith.extui %56 : i1 to i32
    %c0_i32_33 = arith.constant 0 : i32
    %58 = arith.cmpi ne, %57, %c0_i32_33 : i32
    scf.if %58 {
      %c0_34 = arith.constant 0 : index
      %c0_35 = arith.constant 0 : index
      %59 = vector.load %arg17[%c0_34, %c0_35] : memref<8x128xf32, #tpu.memory_space<vmem>>, vector<8x128xf32>
      %c0_36 = arith.constant 0 : index
      %c0_37 = arith.constant 0 : index
      %60 = vector.load %arg13[%c0_36, %c0_37] : memref<1x128xf32, #tpu.memory_space<vmem>>, vector<1x128xf32>
      %61 = vector.broadcast %60 : vector<1x128xf32> to vector<8x128xf32>
      %62 = arith.addf %59, %61 : vector<8x128xf32>
      %63 = arith.addf %3, %62 : vector<8x128xf32>
      %c0_38 = arith.constant 0 : index
      %c0_39 = arith.constant 0 : index
      %64 = vector.load %arg14[%c0_38, %c0_39] : memref<1x128xf32, #tpu.memory_space<vmem>>, vector<1x128xf32>
      %c0_40 = arith.constant 0 : index
      %c0_41 = arith.constant 0 : index
      %65 = vector.load %arg15[%c0_40, %c0_41] : memref<1x128xf32, #tpu.memory_space<vmem>>, vector<1x128xf32>
      %cst_42 = arith.constant dense<0.000000e+00> : vector<8xf32>
      %66 = vector.multi_reduction <add>, %63, %cst_42 [1] : vector<8x128xf32> to vector<8xf32>
      %67 = vector.shape_cast %66 : vector<8xf32> to vector<8x1xf32>
      %cst_43 = arith.constant 1.280000e+02 : f32
      %68 = vector.broadcast %cst_43 : f32 to vector<8x1xf32>
      %69 = arith.divf %67, %68 : vector<8x1xf32>
      %70 = vector.broadcast %69 : vector<8x1xf32> to vector<8x128xf32>
      %71 = arith.subf %63, %70 : vector<8x128xf32>
      %72 = arith.mulf %71, %71 : vector<8x128xf32>
      %cst_44 = arith.constant dense<0.000000e+00> : vector<8xf32>
      %73 = vector.multi_reduction <add>, %72, %cst_44 [1] : vector<8x128xf32> to vector<8xf32>
      %74 = vector.shape_cast %73 : vector<8xf32> to vector<8x1xf32>
      %cst_45 = arith.constant 1.280000e+02 : f32
      %75 = vector.broadcast %cst_45 : f32 to vector<8x1xf32>
      %76 = arith.divf %74, %75 : vector<8x1xf32>
      %77 = vector.broadcast %69 : vector<8x1xf32> to vector<8x128xf32>
      %78 = arith.subf %63, %77 : vector<8x128xf32>
      %cst_46 = arith.constant 9.99999974E-6 : f32
      %79 = vector.broadcast %cst_46 : f32 to vector<8x1xf32>
      %80 = arith.addf %76, %79 : vector<8x1xf32>
      %81 = math.rsqrt %80 : vector<8x1xf32>
      %82 = vector.broadcast %81 : vector<8x1xf32> to vector<8x128xf32>
      %83 = arith.mulf %78, %82 : vector<8x128xf32>
      %84 = vector.broadcast %64 : vector<1x128xf32> to vector<8x128xf32>
      %85 = arith.mulf %83, %84 : vector<8x128xf32>
      %86 = vector.broadcast %65 : vector<1x128xf32> to vector<8x128xf32>
      %87 = arith.addf %85, %86 : vector<8x128xf32>
      %c0_47 = arith.constant 0 : index
      %c0_48 = arith.constant 0 : index
      %88 = vector.load %arg16[%c0_47, %c0_48] : memref<8x128xf32, #tpu.memory_space<vmem>>, vector<8x128xf32>
      tpu.vector_store %arg16[%c0_47, %c0_48], %87 {strides = array<i32>} : memref<8x128xf32, #tpu.memory_space<vmem>>, vector<8x128xf32>,
    } else {
    }
    return
  }
  func.func @transform_0(%arg0: i32, %arg1: i32, %arg2: i32) -> (i32, i32) {
    %c0_i32 = arith.constant 0 : i32
    return %arg1, %arg0 : i32, i32
  }
  func.func @transform_1(%arg0: i32, %arg1: i32, %arg2: i32) -> (i32, i32) {
    %c0_i32 = arith.constant 0 : i32
    %c0_i32_0 = arith.constant 0 : i32
    return %c0_i32, %arg0 : i32, i32
  }
  func.func @transform_2(%arg0: i32, %arg1: i32, %arg2: i32) -> (i32, i32, i32) {
    %c0_i32 = arith.constant 0 : i32
    %c0_i32_0 = arith.constant 0 : i32
    %c0_i32_1 = arith.constant 0 : i32
    return %c0_i32, %arg1, %c0_i32_0 : i32, i32, i32
  }
  func.func @transform_3(%arg0: i32, %arg1: i32, %arg2: i32) -> (i32, i32, i32) {
    %c0_i32 = arith.constant 0 : i32
    %c0_i32_0 = arith.constant 0 : i32
    %c0_i32_1 = arith.constant 0 : i32
    %c0_i32_2 = arith.constant 0 : i32
    return %c0_i32, %c0_i32_0, %c0_i32_1 : i32, i32, i32
  }
  func.func @transform_4(%arg0: i32, %arg1: i32, %arg2: i32) -> (i32, i32, i32) {
    %c0_i32 = arith.constant 0 : i32
    %c0_i32_0 = arith.constant 0 : i32
    %c0_i32_1 = arith.constant 0 : i32
    %c0_i32_2 = arith.constant 0 : i32
    return %c0_i32, %c0_i32_0, %c0_i32_1 : i32, i32, i32
  }
  func.func @transform_5(%arg0: i32, %arg1: i32, %arg2: i32) -> (i32, i32, i32) {
    %c0_i32 = arith.constant 0 : i32
    %c0_i32_0 = arith.constant 0 : i32
    %c0_i32_1 = arith.constant 0 : i32
    %c0_i32_2 = arith.constant 0 : i32
    return %c0_i32, %c0_i32_0, %c0_i32_1 : i32, i32, i32
  }
  func.func @transform_6(%arg0: i32, %arg1: i32, %arg2: i32) -> (i32, i32, i32) {
    %c0_i32 = arith.constant 0 : i32
    %c0_i32_0 = arith.constant 0 : i32
    %c0_i32_1 = arith.constant 0 : i32
    %c0_i32_2 = arith.constant 0 : i32
    return %c0_i32, %c0_i32_0, %c0_i32_1 : i32, i32, i32
  }
  func.func @transform_7(%arg0: i32, %arg1: i32, %arg2: i32) -> (i32, i32, i32) {
    %c0_i32 = arith.constant 0 : i32
    %c0_i32_0 = arith.constant 0 : i32
    %c0_i32_1 = arith.constant 0 : i32
    %c0_i32_2 = arith.constant 0 : i32
    return %c0_i32, %c0_i32_0, %c0_i32_1 : i32, i32, i32
  }
  func.func @transform_8(%arg0: i32, %arg1: i32, %arg2: i32) -> (i32, i32, i32) {
    %c0_i32 = arith.constant 0 : i32
    %c0_i32_0 = arith.constant 0 : i32
    %c0_i32_1 = arith.constant 0 : i32
    %c0_i32_2 = arith.constant 0 : i32
    return %c0_i32, %c0_i32_0, %c0_i32_1 : i32, i32, i32
  }
  func.func @transform_9(%arg0: i32, %arg1: i32, %arg2: i32) -> (i32, i32, i32) {
    %c0_i32 = arith.constant 0 : i32
    %c0_i32_0 = arith.constant 0 : i32
    %c0_i32_1 = arith.constant 0 : i32
    %c0_i32_2 = arith.constant 0 : i32
    return %c0_i32, %c0_i32_0, %c0_i32_1 : i32, i32, i32
  }
  func.func @transform_10(%arg0: i32, %arg1: i32, %arg2: i32) -> (i32, i32) {
    %c0_i32 = arith.constant 0 : i32
    %c0_i32_0 = arith.constant 0 : i32
    %c0_i32_1 = arith.constant 0 : i32
    return %c0_i32, %c0_i32_0 : i32, i32
  }
  func.func @transform_11(%arg0: i32, %arg1: i32, %arg2: i32) -> (i32, i32) {
    %c0_i32 = arith.constant 0 : i32
    %c0_i32_0 = arith.constant 0 : i32
    %c0_i32_1 = arith.constant 0 : i32
    return %c0_i32, %c0_i32_0 : i32, i32
  }
  func.func @transform_12(%arg0: i32, %arg1: i32, %arg2: i32) -> (i32, i32) {
    %c0_i32 = arith.constant 0 : i32
    %c0_i32_0 = arith.constant 0 : i32
    %c0_i32_1 = arith.constant 0 : i32
    return %c0_i32, %c0_i32_0 : i32, i32
  }
  func.func @transform_13(%arg0: i32, %arg1: i32, %arg2: i32) -> (i32, i32) {
    %c0_i32 = arith.constant 0 : i32
    return %arg1, %arg0 : i32, i32
  }
}

</mosaic_0001>

<llo_original>
// kernel: tpu_custom_call.1
$region0: #{tpu_custom_call.1}
  #allocation0 [shape = 'u32[]', space=smem, size = 0x4, offset = 0x4, fixed_abs, tag = 'smem constant byte address 0x4 - core index']
  #allocation1 [shape = 'u32[144,128]{1,0:T(1,128)}', space=vmem, size = 0x12000, scoped, tag = 'internal scratch']
  #allocation2 [shape = 'f32[8,128]{1,0:T(8,128)}', space=vmem, size = 0x1000, scoped, tag = 'scratch operand']
  %s0 = inlined_call_operand.vmem [shape: f32[16,256], index: 0, kind: input, shape index: {}]
  %s1 = inlined_call_operand.vmem [shape: f32[16,256], index: 1, kind: input, shape index: {}]
  %s2 = inlined_call_operand.vmem [shape: f32[1,16,16], index: 2, kind: input, shape index: {}]
  %s3 = inlined_call_operand.vmem [shape: f32[4,128,32], index: 3, kind: input, shape index: {}]
  %s4 = inlined_call_operand.vmem [shape: f32[4,128,32], index: 4, kind: input, shape index: {}]
  %s5 = inlined_call_operand.vmem [shape: f32[4,128,32], index: 5, kind: input, shape index: {}]
  %s6 = inlined_call_operand.vmem [shape: f32[4,1,32], index: 6, kind: input, shape index: {}]
  %s7 = inlined_call_operand.vmem [shape: f32[4,1,32], index: 7, kind: input, shape index: {}]
  %s8 = inlined_call_operand.vmem [shape: f32[4,1,32], index: 8, kind: input, shape index: {}]
  %s9 = inlined_call_operand.vmem [shape: f32[4,32,128], index: 9, kind: input, shape index: {}]
  %s10 = inlined_call_operand.vmem [shape: f32[1,128], index: 10, kind: input, shape index: {}]
  %s11 = inlined_call_operand.vmem [shape: f32[1,128], index: 11, kind: input, shape index: {}]
  %s12 = inlined_call_operand.vmem [shape: f32[1,128], index: 12, kind: input, shape index: {}]
  %s13 = inlined_call_operand.hbm [shape: f32[16,256], index: 13, kind: output, shape index: {}]
  %s14 = sld [smem:[#allocation0]]
  $region131: #{tpu_custom_call.1} parent=0
    _
  %s16 = ssub.s32 1, %s14
  %s17 = scalar_select 0, %s16, %s14
  $region1: #{tpu_custom_call.1} parent=0
    #allocation3 [shape = 'u8[16384]{0}', space=vmem, size = 0x4000, scoped, tag = 'input window, operand 1']
    #allocation4 [shape = 'u8[8192]{0}', space=vmem, size = 0x2000, scoped, tag = 'output window, operand 0']
    #allocation5 [shape = 's32[2]{0}', space=sflag, size = 0x8, scoped, tag = 'scoped memory for tpu_custom_call.1']
    %18 = vsyncpa [#allocation5], 0
    %s19 = scalar_lea.sflag [#allocation5], 1
    %20 = vsyncpa %s19, 0
    loop: start=0, step=1, limit=18
    $region2: #{tpu_custom_call.1} parent=1 // loop_pre_header
      _
    $region3: #{tpu_custom_call.1} parent=1 // loop_header
      %s22 = sphi 0, %s26
      %p23 = scmp.ge.s32.totalorder %s22, 18
      %s29 = sphi 0, %s48
      %s30 = sphi 0, %s44
      %s31 = sphi 0, %s40
      %s32 = sphi 0, %s29
      %s33 = sphi 0, %s30
      %s34 = sphi 0, %s31
      %s35 = sphi 0, %s32
      %s36 = sphi 0, %s33
      %s37 = sphi 0, %s34
      %s53 = sphi 0, %s55
      %s56 = sphi 0, %s53
      %s57 = sphi 0, %s56
      %s73 = sphi 0, %s57
      %s79 = sphi 0, %s81
      %s82 = sphi 0, %s79
      %s83 = sphi 0, %s82
      %s99 = sphi 0, %s83
      %s105 = sphi 0, %s107
      %s108 = sphi 0, %s105
      %s109 = sphi 0, %s108
      %s125 = sphi 0, %s109
      %s129 = sphi 0, %s129
      %s131 = sphi 0, %s129
      %s132 = sphi 0, %s131
      %s146 = sphi 0, %s132
      %s150 = sphi 0, %s150
      %s152 = sphi 0, %s150
      %s153 = sphi 0, %s152
      %s167 = sphi 0, %s153
      %s171 = sphi 0, %s171
      %s173 = sphi 0, %s171
      %s174 = sphi 0, %s173
      %s188 = sphi 0, %s174
      %s192 = sphi 0, %s192
      %s194 = sphi 0, %s192
      %s195 = sphi 0, %s194
      %s209 = sphi 0, %s195
      %s213 = sphi 0, %s213
      %s215 = sphi 0, %s213
      %s216 = sphi 0, %s215
      %s230 = sphi 0, %s216
      %s234 = sphi 0, %s234
      %s236 = sphi 0, %s234
      %s237 = sphi 0, %s236
      %s251 = sphi 0, %s237
      %s255 = sphi 0, %s255
      %s257 = sphi 0, %s255
      %s258 = sphi 0, %s257
      %s272 = sphi 0, %s258
      %s276 = sphi 0, %s276
      %s278 = sphi 0, %s276
      %s279 = sphi 0, %s278
      %s293 = sphi 0, %s279
      %s297 = sphi 0, %s297
      %s299 = sphi 0, %s297
      %s300 = sphi 0, %s299
      %s314 = sphi 0, %s300
      %s318 = sphi 0, %s318
      %s320 = sphi 0, %s318
      %s321 = sphi 0, %s320
      %s335 = sphi 0, %s321
      %s343 = sphi 0, %s345
      %s346 = sphi 0, %s343
      %s347 = sphi 0, %s346
      %s363 = sphi 0, %s347
    $region4: #{tpu_custom_call.1} parent=1 // loop_header_branch
      %25 = sbr.rel (%p23) target = $region8
    $region5: #{tpu_custom_call.1} parent=1 // loop_body
      %s27 = ssub.s32 %s22, 1
      %s28 = ssub.s32 %s22, 2
      %s38 = sadd.s32 1, %s31
      %p39 = scmp.ge.s32.totalorder %s38, 4
      %s40 = scalar_select %p39, 0, %s38
      %s41 = sadd.s32 1, %s30
      %s42 = scalar_select %p39, %s41, %s30
      %p43 = scmp.ge.s32.totalorder %s42, 2
      %s44 = scalar_select %p43, 0, %s42
      %s45 = sadd.s32 1, %s29
      %s46 = scalar_select %p43, %s45, %s29
      %p47 = scmp.ge.s32.totalorder %s46, 2
      %s48 = scalar_select %p47, 0, %s46
      %s49 = ssub.s32 %s30, %s44
      %s50 = ssub.s32 %s29, %s48
      %s51 = sor.u32 %s49, %s50
      %p52 = scmp.eq.s32.totalorder %s51, 0
      %s54 = sadd.s32 %s53, 1
      %s55 = scalar_select %p52, %s53, %s54
      %p58 = pneg %p52
      %p59 = scmp.eq.s32.totalorder %s22, 15
      %p60 = por %p58, %p59
      %p61 = scmp.ne.s32.totalorder %s53, %s56
      %p62 = scmp.eq.s32.totalorder %s22, 0
      %p63 = por %p61, %p62
      %p64 = scmp.ne.s32.totalorder %s53, %s56
      %p65 = scmp.eq.s32.totalorder %s27, 15
      %p66 = por %p64, %p65
      %p67 = scmp.ne.s32.totalorder %s56, %s57
      %p68 = scmp.eq.s32.totalorder %s27, 0
      %p69 = por %p67, %p68
      %p70 = scmp.ne.s32.totalorder %s56, %s57
      %p71 = scmp.eq.s32.totalorder %s28, 15
      %p72 = por %p70, %p71
      %p74 = scmp.ne.s32.totalorder %s57, %s73
      %p75 = scmp.eq.s32.totalorder %s28, 0
      %p76 = por %p74, %p75
      %s77 = ssub.s32 %s29, %s48
      %p78 = scmp.eq.s32.totalorder %s77, 0
      %s80 = sadd.s32 %s79, 1
      %s81 = scalar_select %p78, %s79, %s80
      %p84 = pneg %p78
      %p85 = scmp.eq.s32.totalorder %s22, 15
      %p86 = por %p84, %p85
      %p87 = scmp.ne.s32.totalorder %s79, %s82
      %p88 = scmp.eq.s32.totalorder %s22, 0
      %p89 = por %p87, %p88
      %p90 = scmp.ne.s32.totalorder %s79, %s82
      %p91 = scmp.eq.s32.totalorder %s27, 15
      %p92 = por %p90, %p91
      %p93 = scmp.ne.s32.totalorder %s82, %s83
      %p94 = scmp.eq.s32.totalorder %s27, 0
      %p95 = por %p93, %p94
      %p96 = scmp.ne.s32.totalorder %s82, %s83
      %p97 = scmp.eq.s32.totalorder %s28, 15
      %p98 = por %p96, %p97
      %p100 = scmp.ne.s32.totalorder %s83, %s99
      %p101 = scmp.eq.s32.totalorder %s28, 0
      %p102 = por %p100, %p101
      %s103 = ssub.s32 %s30, %s44
      %p104 = scmp.eq.s32.totalorder %s103, 0
      %s106 = sadd.s32 %s105, 1
      %s107 = scalar_select %p104, %s105, %s106
      %p110 = pneg %p104
      %p111 = scmp.eq.s32.totalorder %s22, 15
      %p112 = por %p110, %p111
      %p113 = scmp.ne.s32.totalorder %s105, %s108
      %p114 = scmp.eq.s32.totalorder %s22, 0
      %p115 = por %p113, %p114
      %p116 = scmp.ne.s32.totalorder %s105, %s108
      %p117 = scmp.eq.s32.totalorder %s27, 15
      %p118 = por %p116, %p117
      %p119 = scmp.ne.s32.totalorder %s108, %s109
      %p120 = scmp.eq.s32.totalorder %s27, 0
      %p121 = por %p119, %p120
      %p122 = scmp.ne.s32.totalorder %s108, %s109
      %p123 = scmp.eq.s32.totalorder %s28, 15
      %p124 = por %p122, %p123
      %p126 = scmp.ne.s32.totalorder %s109, %s125
      %p127 = scmp.eq.s32.totalorder %s28, 0
      %p128 = por %p126, %p127
      %s130 = sadd.s32 %s129, 1
      %p133 = scmp.eq.s32.totalorder %s22, 15
      %p134 = scmp.ne.s32.totalorder %s129, %s131
      %p135 = scmp.eq.s32.totalorder %s22, 0
      %p136 = por %p134, %p135
      %p137 = scmp.ne.s32.totalorder %s129, %s131
      %p138 = scmp.eq.s32.totalorder %s27, 15
      %p139 = por %p137, %p138
      %p140 = scmp.ne.s32.totalorder %s131, %s132
      %p141 = scmp.eq.s32.totalorder %s27, 0
      %p142 = por %p140, %p141
      %p143 = scmp.ne.s32.totalorder %s131, %s132
      %p144 = scmp.eq.s32.totalorder %s28, 15
      %p145 = por %p143, %p144
      %p147 = scmp.ne.s32.totalorder %s132, %s146
      %p148 = scmp.eq.s32.totalorder %s28, 0
      %p149 = por %p147, %p148
      %s151 = sadd.s32 %s150, 1
      %p154 = scmp.eq.s32.totalorder %s22, 15
      %p155 = scmp.ne.s32.totalorder %s150, %s152
      %p156 = scmp.eq.s32.totalorder %s22, 0
      %p157 = por %p155, %p156
      %p158 = scmp.ne.s32.totalorder %s150, %s152
      %p159 = scmp.eq.s32.totalorder %s27, 15
      %p160 = por %p158, %p159
      %p161 = scmp.ne.s32.totalorder %s152, %s153
      %p162 = scmp.eq.s32.totalorder %s27, 0
      %p163 = por %p161, %p162
      %p164 = scmp.ne.s32.totalorder %s152, %s153
      %p165 = scmp.eq.s32.totalorder %s28, 15
      %p166 = por %p164, %p165
      %p168 = scmp.ne.s32.totalorder %s153, %s167
      %p169 = scmp.eq.s32.totalorder %s28, 0
      %p170 = por %p168, %p169
      %s172 = sadd.s32 %s171, 1
      %p175 = scmp.eq.s32.totalorder %s22, 15
      %p176 = scmp.ne.s32.totalorder %s171, %s173
      %p177 = scmp.eq.s32.totalorder %s22, 0
      %p178 = por %p176, %p177
      %p179 = scmp.ne.s32.totalorder %s171, %s173
      %p180 = scmp.eq.s32.totalorder %s27, 15
      %p181 = por %p179, %p180
      %p182 = scmp.ne.s32.totalorder %s173, %s174
      %p183 = scmp.eq.s32.totalorder %s27, 0
      %p184 = por %p182, %p183
      %p185 = scmp.ne.s32.totalorder %s173, %s174
      %p186 = scmp.eq.s32.totalorder %s28, 15
      %p187 = por %p185, %p186
      %p189 = scmp.ne.s32.totalorder %s174, %s188
      %p190 = scmp.eq.s32.totalorder %s28, 0
      %p191 = por %p189, %p190
      %s193 = sadd.s32 %s192, 1
      %p196 = scmp.eq.s32.totalorder %s22, 15
      %p197 = scmp.ne.s32.totalorder %s192, %s194
      %p198 = scmp.eq.s32.totalorder %s22, 0
      %p199 = por %p197, %p198
      %p200 = scmp.ne.s32.totalorder %s192, %s194
      %p201 = scmp.eq.s32.totalorder %s27, 15
      %p202 = por %p200, %p201
      %p203 = scmp.ne.s32.totalorder %s194, %s195
      %p204 = scmp.eq.s32.totalorder %s27, 0
      %p205 = por %p203, %p204
      %p206 = scmp.ne.s32.totalorder %s194, %s195
      %p207 = scmp.eq.s32.totalorder %s28, 15
      %p208 = por %p206, %p207
      %p210 = scmp.ne.s32.totalorder %s195, %s209
      %p211 = scmp.eq.s32.totalorder %s28, 0
      %p212 = por %p210, %p211
      %s214 = sadd.s32 %s213, 1
      %p217 = scmp.eq.s32.totalorder %s22, 15
      %p218 = scmp.ne.s32.totalorder %s213, %s215
      %p219 = scmp.eq.s32.totalorder %s22, 0
      %p220 = por %p218, %p219
      %p221 = scmp.ne.s32.totalorder %s213, %s215
      %p222 = scmp.eq.s32.totalorder %s27, 15
      %p223 = por %p221, %p222
      %p224 = scmp.ne.s32.totalorder %s215, %s216
      %p225 = scmp.eq.s32.totalorder %s27, 0
      %p226 = por %p224, %p225
      %p227 = scmp.ne.s32.totalorder %s215, %s216
      %p228 = scmp.eq.s32.totalorder %s28, 15
      %p229 = por %p227, %p228
      %p231 = scmp.ne.s32.totalorder %s216, %s230
      %p232 = scmp.eq.s32.totalorder %s28, 0
      %p233 = por %p231, %p232
      %s235 = sadd.s32 %s234, 1
      %p238 = scmp.eq.s32.totalorder %s22, 15
      %p239 = scmp.ne.s32.totalorder %s234, %s236
      %p240 = scmp.eq.s32.totalorder %s22, 0
      %p241 = por %p239, %p240
      %p242 = scmp.ne.s32.totalorder %s234, %s236
      %p243 = scmp.eq.s32.totalorder %s27, 15
      %p244 = por %p242, %p243
      %p245 = scmp.ne.s32.totalorder %s236, %s237
      %p246 = scmp.eq.s32.totalorder %s27, 0
      %p247 = por %p245, %p246
      %p248 = scmp.ne.s32.totalorder %s236, %s237
      %p249 = scmp.eq.s32.totalorder %s28, 15
      %p250 = por %p248, %p249
      %p252 = scmp.ne.s32.totalorder %s237, %s251
      %p253 = scmp.eq.s32.totalorder %s28, 0
      %p254 = por %p252, %p253
      %s256 = sadd.s32 %s255, 1
      %p259 = scmp.eq.s32.totalorder %s22, 15
      %p260 = scmp.ne.s32.totalorder %s255, %s257
      %p261 = scmp.eq.s32.totalorder %s22, 0
      %p262 = por %p260, %p261
      %p263 = scmp.ne.s32.totalorder %s255, %s257
      %p264 = scmp.eq.s32.totalorder %s27, 15
      %p265 = por %p263, %p264
      %p266 = scmp.ne.s32.totalorder %s257, %s258
      %p267 = scmp.eq.s32.totalorder %s27, 0
      %p268 = por %p266, %p267
      %p269 = scmp.ne.s32.totalorder %s257, %s258
      %p270 = scmp.eq.s32.totalorder %s28, 15
      %p271 = por %p269, %p270
      %p273 = scmp.ne.s32.totalorder %s258, %s272
      %p274 = scmp.eq.s32.totalorder %s28, 0
      %p275 = por %p273, %p274
      %s277 = sadd.s32 %s276, 1
      %p280 = scmp.eq.s32.totalorder %s22, 15
      %p281 = scmp.ne.s32.totalorder %s276, %s278
      %p282 = scmp.eq.s32.totalorder %s22, 0
      %p283 = por %p281, %p282
      %p284 = scmp.ne.s32.totalorder %s276, %s278
      %p285 = scmp.eq.s32.totalorder %s27, 15
      %p286 = por %p284, %p285
      %p287 = scmp.ne.s32.totalorder %s278, %s279
      %p288 = scmp.eq.s32.totalorder %s27, 0
      %p289 = por %p287, %p288
      %p290 = scmp.ne.s32.totalorder %s278, %s279
      %p291 = scmp.eq.s32.totalorder %s28, 15
      %p292 = por %p290, %p291
      %p294 = scmp.ne.s32.totalorder %s279, %s293
      %p295 = scmp.eq.s32.totalorder %s28, 0
      %p296 = por %p294, %p295
      %s298 = sadd.s32 %s297, 1
      %p301 = scmp.eq.s32.totalorder %s22, 15
      %p302 = scmp.ne.s32.totalorder %s297, %s299
      %p303 = scmp.eq.s32.totalorder %s22, 0
      %p304 = por %p302, %p303
      %p305 = scmp.ne.s32.totalorder %s297, %s299
      %p306 = scmp.eq.s32.totalorder %s27, 15
      %p307 = por %p305, %p306
      %p308 = scmp.ne.s32.totalorder %s299, %s300
      %p309 = scmp.eq.s32.totalorder %s27, 0
      %p310 = por %p308, %p309
      %p311 = scmp.ne.s32.totalorder %s299, %s300
      %p312 = scmp.eq.s32.totalorder %s28, 15
      %p313 = por %p311, %p312
      %p315 = scmp.ne.s32.totalorder %s300, %s314
      %p316 = scmp.eq.s32.totalorder %s28, 0
      %p317 = por %p315, %p316
      %s319 = sadd.s32 %s318, 1
      %p322 = scmp.eq.s32.totalorder %s22, 15
      %p323 = scmp.ne.s32.totalorder %s318, %s320
      %p324 = scmp.eq.s32.totalorder %s22, 0
      %p325 = por %p323, %p324
      %p326 = scmp.ne.s32.totalorder %s318, %s320
      %p327 = scmp.eq.s32.totalorder %s27, 15
      %p328 = por %p326, %p327
      %p329 = scmp.ne.s32.totalorder %s320, %s321
      %p330 = scmp.eq.s32.totalorder %s27, 0
      %p331 = por %p329, %p330
      %p332 = scmp.ne.s32.totalorder %s320, %s321
      %p333 = scmp.eq.s32.totalorder %s28, 15
      %p334 = por %p332, %p333
      %p336 = scmp.ne.s32.totalorder %s321, %s335
      %p337 = scmp.eq.s32.totalorder %s28, 0
      %p338 = por %p336, %p337
      %s339 = ssub.s32 %s30, %s44
      %s340 = ssub.s32 %s29, %s48
      %s341 = sor.u32 %s339, %s340
      %p342 = scmp.eq.s32.totalorder %s341, 0
      %s344 = sadd.s32 %s343, 1
      %s345 = scalar_select %p342, %s343, %s344
      %p348 = pneg %p342
      %p349 = scmp.eq.s32.totalorder %s22, 15
      %p350 = por %p348, %p349
      %p351 = scmp.ne.s32.totalorder %s343, %s346
      %p352 = scmp.eq.s32.totalorder %s22, 0
      %p353 = por %p351, %p352
      %p354 = scmp.ne.s32.totalorder %s343, %s346
      %p355 = scmp.eq.s32.totalorder %s27, 15
      %p356 = por %p354, %p355
      %p357 = scmp.ne.s32.totalorder %s346, %s347
      %p358 = scmp.eq.s32.totalorder %s27, 0
      %p359 = por %p357, %p358
      %p360 = scmp.ne.s32.totalorder %s346, %s347
      %p361 = scmp.eq.s32.totalorder %s28, 15
      %p362 = por %p360, %p361
      %p364 = scmp.ne.s32.totalorder %s347, %s363
      %p365 = scmp.eq.s32.totalorder %s28, 0
      %p366 = por %p364, %p365
      %p367 = scmp.le.s32.totalorder 1, %s22
      %p368 = scmp.lt.s32.totalorder %s22, 17
      %p369 = pnand %p367, %p368
      %p370 = pneg %p369
      // Predicated region
      $region9: #{tpu_custom_call.1} parent=5 // pred_check
        _
      $region10: #{tpu_custom_call.1} parent=5 // pred_check_branch
        %372 = sbr.rel (%p369) target = $region12
      $region11: #{tpu_custom_call.1} parent=5 // pred_region
        %s373 = ssub.s32 %s22, 1
        // Predicated region
        $region13: #{tpu_custom_call.1} parent=11 // pred_check
          %p374 = pneg %p142
        $region14: #{tpu_custom_call.1} parent=11 // pred_check_branch
          %376 = sbr.rel (%p374) target = $region16
        $region15: #{tpu_custom_call.1} parent=11 // pred_region
          _
        $region16: #{tpu_custom_call.1} parent=11 // pred_fallthru
          _
        // Predicated region
        $region17: #{tpu_custom_call.1} parent=11 // pred_check
          %p377 = pneg %p163
        $region18: #{tpu_custom_call.1} parent=11 // pred_check_branch
          %379 = sbr.rel (%p377) target = $region20
        $region19: #{tpu_custom_call.1} parent=11 // pred_region
          _
        $region20: #{tpu_custom_call.1} parent=11 // pred_fallthru
          _
        // Predicated region
        $region21: #{tpu_custom_call.1} parent=11 // pred_check
          %p380 = pneg %p184
        $region22: #{tpu_custom_call.1} parent=11 // pred_check_branch
          %382 = sbr.rel (%p380) target = $region24
        $region23: #{tpu_custom_call.1} parent=11 // pred_region
          _
        $region24: #{tpu_custom_call.1} parent=11 // pred_fallthru
          _
        // Predicated region
        $region25: #{tpu_custom_call.1} parent=11 // pred_check
          %p383 = pneg %p205
        $region26: #{tpu_custom_call.1} parent=11 // pred_check_branch
          %385 = sbr.rel (%p383) target = $region28
        $region27: #{tpu_custom_call.1} parent=11 // pred_region
          _
        $region28: #{tpu_custom_call.1} parent=11 // pred_fallthru
          _
        // Predicated region
        $region29: #{tpu_custom_call.1} parent=11 // pred_check
          %p386 = pneg %p226
        $region30: #{tpu_custom_call.1} parent=11 // pred_check_branch
          %388 = sbr.rel (%p386) target = $region32
        $region31: #{tpu_custom_call.1} parent=11 // pred_region
          _
        $region32: #{tpu_custom_call.1} parent=11 // pred_fallthru
          _
        // Predicated region
        $region33: #{tpu_custom_call.1} parent=11 // pred_check
          %p389 = pneg %p247
        $region34: #{tpu_custom_call.1} parent=11 // pred_check_branch
          %391 = sbr.rel (%p389) target = $region36
        $region35: #{tpu_custom_call.1} parent=11 // pred_region
          _
        $region36: #{tpu_custom_call.1} parent=11 // pred_fallthru
          _
        // Predicated region
        $region37: #{tpu_custom_call.1} parent=11 // pred_check
          %p392 = pneg %p268
        $region38: #{tpu_custom_call.1} parent=11 // pred_check_branch
          %394 = sbr.rel (%p392) target = $region40
        $region39: #{tpu_custom_call.1} parent=11 // pred_region
          _
        $region40: #{tpu_custom_call.1} parent=11 // pred_fallthru
          _
        // Predicated region
        $region41: #{tpu_custom_call.1} parent=11 // pred_check
          %p395 = pneg %p289
        $region42: #{tpu_custom_call.1} parent=11 // pred_check_branch
          %397 = sbr.rel (%p395) target = $region44
        $region43: #{tpu_custom_call.1} parent=11 // pred_region
          _
        $region44: #{tpu_custom_call.1} parent=11 // pred_fallthru
          _
        // Predicated region
        $region45: #{tpu_custom_call.1} parent=11 // pred_check
          %p398 = pneg %p310
        $region46: #{tpu_custom_call.1} parent=11 // pred_check_branch
          %400 = sbr.rel (%p398) target = $region48
        $region47: #{tpu_custom_call.1} parent=11 // pred_region
          _
        $region48: #{tpu_custom_call.1} parent=11 // pred_fallthru
          _
        // Predicated region
        $region49: #{tpu_custom_call.1} parent=11 // pred_check
          %p401 = pneg %p331
        $region50: #{tpu_custom_call.1} parent=11 // pred_check_branch
          %403 = sbr.rel (%p401) target = $region52
        $region51: #{tpu_custom_call.1} parent=11 // pred_region
          _
        $region52: #{tpu_custom_call.1} parent=11 // pred_fallthru
          _
      $region12: #{tpu_custom_call.1} parent=5 // pred_fallthru
        _
      %p404 = scmp.lt.s32.totalorder %s22, 16
      // Predicated region
      $region53: #{tpu_custom_call.1} parent=5 // pred_check
        %p405 = pneg %p404
      $region54: #{tpu_custom_call.1} parent=5 // pred_check_branch
        %407 = sbr.rel (%p405) target = $region56
      $region55: #{tpu_custom_call.1} parent=5 // pred_region
        // Predicated region
        $region57: #{tpu_custom_call.1} parent=55 // pred_check
          %p408 = pneg %p63
        $region58: #{tpu_custom_call.1} parent=55 // pred_check_branch
          %410 = sbr.rel (%p408) target = $region60
        $region59: #{tpu_custom_call.1} parent=55 // pred_region
          %p411 = scmp.lt.s32.totalorder %s30, 1
          %s412 = scalar_select %p411, %s30, 1
          %p413 = scmp.lt.s32.totalorder %s29, 1
          %s414 = scalar_select %p413, %s29, 1
          %s415 = smul.addr %s412, 2
          %s416 = sadd.s32 %s414, %s415
          %s417 = smul.addr %s416, 8
          %s418 = scalar_lea.vmem %s0, %s417
        $region60: #{tpu_custom_call.1} parent=55 // pred_fallthru
          _
        // Predicated region
        $region61: #{tpu_custom_call.1} parent=55 // pred_check
          %p419 = pneg %p89
        $region62: #{tpu_custom_call.1} parent=55 // pred_check_branch
          %421 = sbr.rel (%p419) target = $region64
        $region63: #{tpu_custom_call.1} parent=55 // pred_region
          %s422 = sand.u32 %s79, 1
          %s423 = sand.u32 %s79, 1
          %s424 = smul.addr %s423, 16
          %s425 = scalar_lea.vmem [#allocation3], %s424
          %s426 = smul.addr %s29, 8
          %s427 = scalar_lea.vmem %s1, %s426
          // Predicated region
          $region65: #{tpu_custom_call.1} parent=63 // pred_check
            _
          $region66: #{tpu_custom_call.1} parent=63 // pred_check_branch
            %429 = sbr.rel (0) target = $region68
          $region67: #{tpu_custom_call.1} parent=63 // pred_region
            // Predicated region
            $region69: #{tpu_custom_call.1} parent=67 // pred_check
              _
            $region70: #{tpu_custom_call.1} parent=67 // pred_check_branch
              %431 = sbr.rel (0) target = $region72
            $region71: #{tpu_custom_call.1} parent=67 // pred_region
              // Predicated region
              $region84: #{tpu_custom_call.1} parent=71 // pred_check
                _
              $region85: #{tpu_custom_call.1} parent=71 // pred_check_branch
                %449 = sbr.rel (0) target = $region87
              $region86: #{tpu_custom_call.1} parent=71 // pred_region
                loop: start=0, step=1, limit=1
                $region88: #{tpu_custom_call.1} parent=86 // loop_pre_header
                  _
                $region89: #{tpu_custom_call.1} parent=86 // loop_header
                  %s451 = sphi 0, %s455
                  %p452 = scmp.ge.s32.totalorder %s451, 1
                  %s456 = sphi %s427, %s427
                  %s457 = sphi %s425, %s425
                $region90: #{tpu_custom_call.1} parent=86 // loop_header_branch
                  %454 = sbr.rel (%p452) target = $region94
                $region91: #{tpu_custom_call.1} parent=86 // loop_body
                  %v458 = vld [vmem:[%s456] sm:$0xff]
                  %459 = vst [vmem:[%s457] sm:$0xff] %v458
                  %v460 = vld [vmem:[%s456 + $0x10] sm:$0xff]
                  %461 = vst [vmem:[%s457 + $0x8] sm:$0xff] %v460
                $region92: #{tpu_custom_call.1} parent=86 // loop_footer
                  %s455 = sadd.s32 1, %s451
                $region93: #{tpu_custom_call.1} parent=86 // loop_footer_branch
                  %450 = sbr.rel target = $region89
                $region94: #{tpu_custom_call.1} parent=86 // loop_exit
                  _
              $region87: #{tpu_custom_call.1} parent=71 // pred_fallthru
                _
              // Predicated region
              $region95: #{tpu_custom_call.1} parent=71 // pred_check
                _
              $region96: #{tpu_custom_call.1} parent=71 // pred_check_branch
                %463 = sbr.rel target = $region98
              $region97: #{tpu_custom_call.1} parent=71 // pred_region
                _
              $region98: #{tpu_custom_call.1} parent=71 // pred_fallthru
                _
            $region72: #{tpu_custom_call.1} parent=67 // pred_fallthru
              _
            // Predicated region
            $region73: #{tpu_custom_call.1} parent=67 // pred_check
              _
            $region74: #{tpu_custom_call.1} parent=67 // pred_check_branch
              %433 = sbr.rel target = $region76
            $region75: #{tpu_custom_call.1} parent=67 // pred_region
              %s435 = ssub.s32 256, 1
              loop: start=0, step=1, limit=1
              $region77: #{tpu_custom_call.1} parent=75 // loop_pre_header
                _
              $region78: #{tpu_custom_call.1} parent=75 // loop_header
                %s437 = sphi 0, %s441
                %p438 = scmp.ge.s32.totalorder %s437, 1
                %s442 = sphi %s427, %s427
                %s443 = sphi %s425, %s425
              $region79: #{tpu_custom_call.1} parent=75 // loop_header_branch
                %440 = sbr.rel (%p438) target = $region83
              $region80: #{tpu_custom_call.1} parent=75 // loop_body
                %v444 = vld [vmem:[%s442] sm:%s435]
                %445 = vst [vmem:[%s443] sm:%s435] %v444
                %v446 = vld [vmem:[%s442 + $0x10] sm:%s435]
                %447 = vst [vmem:[%s443 + $0x8] sm:%s435] %v446
              $region81: #{tpu_custom_call.1} parent=75 // loop_footer
                %s441 = sadd.s32 1, %s437
              $region82: #{tpu_custom_call.1} parent=75 // loop_footer_branch
                %436 = sbr.rel target = $region78
              $region83: #{tpu_custom_call.1} parent=75 // loop_exit
                _
            $region76: #{tpu_custom_call.1} parent=67 // pred_fallthru
              _
          $region68: #{tpu_custom_call.1} parent=63 // pred_fallthru
            _
          %464 = vnop
        $region64: #{tpu_custom_call.1} parent=55 // pred_fallthru
          _
        // Predicated region
        $region99: #{tpu_custom_call.1} parent=55 // pred_check
          %p465 = pneg %p115
        $region100: #{tpu_custom_call.1} parent=55 // pred_check_branch
          %467 = sbr.rel (%p465) target = $region102
        $region101: #{tpu_custom_call.1} parent=55 // pred_region
          %p468 = scmp.lt.s32.totalorder %s30, 1
          %s469 = scalar_select %p468, %s30, 1
          %s470 = smul.addr %s469, 8
          %s471 = scalar_lea.vmem %s2, %s470
        $region102: #{tpu_custom_call.1} parent=55 // pred_fallthru
          _
      $region56: #{tpu_custom_call.1} parent=5 // pred_fallthru
        _
      %p472 = scmp.le.s32.totalorder 1, %s22
      %p473 = scmp.lt.s32.totalorder %s22, 17
      %p474 = pnand %p472, %p473
      %p475 = pneg %p474
      // Predicated region
      $region103: #{tpu_custom_call.1} parent=5 // pred_check
        _
      $region104: #{tpu_custom_call.1} parent=5 // pred_check_branch
        %477 = sbr.rel (%p474) target = $region106
      $region105: #{tpu_custom_call.1} parent=5 // pred_region
        %s478 = ssub.s32 %s22, 1
        %s479 = sand.u32 %s82, 1
        %s480 = sand.u32 %s82, 1
        %s481 = smul.addr %s480, 16
        %s482 = scalar_lea.vmem [#allocation3], %s481
        // Predicated region
        $region107: #{tpu_custom_call.1} parent=105 // pred_check
          %p483 = pneg %p95
        $region108: #{tpu_custom_call.1} parent=105 // pred_check_branch
          %485 = sbr.rel (%p483) target = $region110
        $region109: #{tpu_custom_call.1} parent=105 // pred_region
          _
        $region110: #{tpu_custom_call.1} parent=105 // pred_fallthru
          _
        %p486 = scmp.lt.s32.totalorder %s33, 1
        %s487 = scalar_select %p486, %s33, 1
        %p488 = scmp.lt.s32.totalorder %s32, 1
        %s489 = scalar_select %p488, %s32, 1
        %s490 = smul.addr %s487, 2
        %s491 = sadd.s32 %s489, %s490
        %s492 = smul.addr %s491, 8
        %s493 = scalar_lea.vmem %s0, %s492
        %p494 = pneg %p69
        %p495 = pneg %p66
        %s496 = sand.u32 %s82, 1
        %s497 = sand.u32 %s82, 1
        %s498 = smul.addr %s497, 16
        %s499 = scalar_lea.vmem [#allocation3], %s498
        %p500 = pneg %p95
        %p501 = pneg %p92
        %p502 = scmp.lt.s32.totalorder %s33, 1
        %s503 = scalar_select %p502, %s33, 1
        %s504 = smul.addr %s503, 8
        %s505 = scalar_lea.vmem %s2, %s504
        %p506 = pneg %p121
        %p507 = pneg %p118
        %p508 = pneg %p142
        %p509 = pneg %p139
        %p510 = pneg %p163
        %p511 = pneg %p160
        %p512 = pneg %p184
        %p513 = pneg %p181
        %p514 = pneg %p205
        %p515 = pneg %p202
        %p516 = pneg %p226
        %p517 = pneg %p223
        %p518 = pneg %p247
        %p519 = pneg %p244
        %p520 = pneg %p268
        %p521 = pneg %p265
        %p522 = pneg %p289
        %p523 = pneg %p286
        %p524 = pneg %p310
        %p525 = pneg %p307
        %p526 = pneg %p331
        %p527 = pneg %p328
        %p528 = pneg %p359
        %p529 = pneg %p356
        %s530 = sand.u32 %s346, 1
        %s531 = scalar_lea.sflag [#allocation5], %s530
        %s532 = sand.u32 %s346, 1
        %s533 = smul.addr %s532, 8
        %s534 = scalar_lea.vmem [#allocation4], %s533
        %p535 = scmp.lt.s32.totalorder %s33, 1
        %s536 = scalar_select %p535, %s33, 1
        %p537 = scmp.lt.s32.totalorder %s32, 1
        %s538 = scalar_select %p537, %s32, 1
        %s539 = smul.addr %s536, 2
        %s540 = sadd.s32 %s538, %s539
        %s541 = smul.addr %s540, 8
        %s542 = scalar_lea.vmem %s0, %s541
        %p543 = scmp.lt.s32.totalorder %s33, 1
        %s544 = scalar_select %p543, %s33, 1
        %s545 = smul.addr %s544, 8
        %s546 = scalar_lea.vmem %s2, %s545
        %p547 = scmp.eq.s32.totalorder %s34, 0
        // Predicated region
        $region111: #{tpu_custom_call.1} parent=105 // pred_check
          %p548 = pneg %p547
        $region112: #{tpu_custom_call.1} parent=105 // pred_check_branch
          %550 = sbr.rel (%p548) target = $region114
        $region113: #{tpu_custom_call.1} parent=105 // pred_region
          %551 = vst [vmem:[#allocation2] sm:$0xff] 0.0
        $region114: #{tpu_custom_call.1} parent=105 // pred_fallthru
          _
        %v552 = vld [vmem:[%s542] sm:$0xff]
        %v553 = vld [vmem:[%s482] sm:$0xff]
        %v554 = vld [vmem:[%s482 + $0x8] sm:$0xff]
        %s555 = smul.u32 %s34, 128
        %s556 = scalar_lea.vmem %s3, %s555
        %v557 = vld [vmem:[%s556] sm:$0xff]
        %v558 = vld [vmem:[%s556 + $0x8] sm:$0xff]
        %v559 = vld [vmem:[%s556 + $0x10] sm:$0xff]
        %v560 = vld [vmem:[%s556 + $0x18] sm:$0xff]
        %v561 = vld [vmem:[%s556 + $0x20] sm:$0xff]
        %v562 = vld [vmem:[%s556 + $0x28] sm:$0xff]
        %v563 = vld [vmem:[%s556 + $0x30] sm:$0xff]
        %v564 = vld [vmem:[%s556 + $0x38] sm:$0xff]
        %v565 = vld [vmem:[%s556 + $0x40] sm:$0xff]
        %v566 = vld [vmem:[%s556 + $0x48] sm:$0xff]
        %v567 = vld [vmem:[%s556 + $0x50] sm:$0xff]
        %v568 = vld [vmem:[%s556 + $0x58] sm:$0xff]
        %v569 = vld [vmem:[%s556 + $0x60] sm:$0xff]
        %v570 = vld [vmem:[%s556 + $0x68] sm:$0xff]
        %v571 = vld [vmem:[%s556 + $0x70] sm:$0xff]
        %v572 = vld [vmem:[%s556 + $0x78] sm:$0xff]
        %s573 = scalar_lea.vmem %s6, %s34
        %v574 = vld [vmem:[%s573] sm:$0x1]
        %v576 = vlaneseq
        %v577 = vshrl.u32 %v576, 7
        %v578 = vsub.s32 0, %v577
        %v579 = vrot.slane %v574, %v578
        %581 = vmatprep.subr.mxu0 0.0
        %582 = vmatpush1.msra.mxu0 %v572
        %583 = vmatprep.subr.mxu0 0.0
        %584 = vmatpush1.msra.mxu0 %v571
        %585 = vmatprep.subr.mxu0 0.0
        %586 = vmatpush1.msra.mxu0 %v570
        %587 = vmatprep.subr.mxu0 0.0
        %588 = vmatpush1.msra.mxu0 %v569
        %589 = vmatprep.subr.mxu0 0.0
        %590 = vmatpush1.msra.mxu0 %v568
        %591 = vmatprep.subr.mxu0 0.0
        %592 = vmatpush1.msra.mxu0 %v567
        %593 = vmatprep.subr.mxu0 0.0
        %594 = vmatpush1.msra.mxu0 %v566
        %595 = vmatprep.subr.mxu0 0.0
        %596 = vmatpush1.msra.mxu0 %v565
        %597 = vmatprep.subr.mxu0 0.0
        %598 = vmatpush1.msra.mxu0 %v564
        %599 = vmatprep.subr.mxu0 0.0
        %600 = vmatpush1.msra.mxu0 %v563
        %601 = vmatprep.subr.mxu0 0.0
        %602 = vmatpush1.msra.mxu0 %v562
        %603 = vmatprep.subr.mxu0 0.0
        %604 = vmatpush1.msra.mxu0 %v561
        %605 = vmatprep.subr.mxu0 0.0
        %606 = vmatpush1.msra.mxu0 %v560
        %607 = vmatprep.subr.mxu0 0.0
        %608 = vmatpush1.msra.mxu0 %v559
        %609 = vmatprep.subr.mxu0 0.0
        %610 = vmatpush1.msra.mxu0 %v558
        %611 = vmatprep.subr.mxu0 0.0
        %612 = vmatpush1.msra.mxu0 %v557
        %613 = vmatprep.subr.mxu0 0.0
        %614 = vmatpush2.msra.mxu0 0.0
        %615 = vmatprep.subr.mxu0 0.0
        %616 = vmatpush2.msra.mxu0 0.0
        %617 = vmatprep.subr.mxu0 0.0
        %618 = vmatpush2.msra.mxu0 0.0
        %619 = vmatprep.subr.mxu0 0.0
        %620 = vmatpush2.msra.mxu0 0.0
        %621 = vmatprep.subr.mxu0 0.0
        %622 = vmatpush2.msra.mxu0 0.0
        %623 = vmatprep.subr.mxu0 0.0
        %624 = vmatpush2.msra.mxu0 0.0
        %625 = vmatprep.subr.mxu0 0.0
        %626 = vmatpush2.msra.mxu0 0.0
        %627 = vmatprep.subr.mxu0 0.0
        %628 = vmatpush2.msra.mxu0 0.0
        %629 = vmatprep.subr.mxu0 0.0
        %630 = vmatpush2.msra.mxu0 0.0
        %631 = vmatprep.subr.mxu0 0.0
        %632 = vmatpush2.msra.mxu0 0.0
        %633 = vmatprep.subr.mxu0 0.0
        %634 = vmatpush2.msra.mxu0 0.0
        %635 = vmatprep.subr.mxu0 0.0
        %636 = vmatpush2.msra.mxu0 0.0
        %637 = vmatprep.subr.mxu0 0.0
        %638 = vmatpush2.msra.mxu0 0.0
        %639 = vmatprep.subr.mxu0 0.0
        %640 = vmatpush2.msra.mxu0 0.0
        %641 = vmatprep.subr.mxu0 0.0
        %642 = vmatpush2.msra.mxu0 0.0
        %643 = vmatprep.subr.mxu0 0.0
        %644 = vmatpush2.msra.mxu0 0.0
        %645 = vmatprep.mubr.f32.mxu0 0.0
        %646 = vmatmul.mubr.f32.gmra.mxu0 %v552
        %v647 = vpop.f32.mrf.mxu0
        %v648 = vadd.f32 %v579, %v647
        %v649 = vpop.f32.mrf.mxu0
        %650 = vdwg.mxu0
        %v651 = vmul.f32 %v648, 0.17677669
        %s652 = scalar_lea.vmem %s4, %s555
        %v653 = vld [vmem:[%s652] sm:$0xff]
        %v654 = vld [vmem:[%s652 + $0x8] sm:$0xff]
        %v655 = vld [vmem:[%s652 + $0x10] sm:$0xff]
        %v656 = vld [vmem:[%s652 + $0x18] sm:$0xff]
        %v657 = vld [vmem:[%s652 + $0x20] sm:$0xff]
        %v658 = vld [vmem:[%s652 + $0x28] sm:$0xff]
        %v659 = vld [vmem:[%s652 + $0x30] sm:$0xff]
        %v660 = vld [vmem:[%s652 + $0x38] sm:$0xff]
        %v661 = vld [vmem:[%s652 + $0x40] sm:$0xff]
        %v662 = vld [vmem:[%s652 + $0x48] sm:$0xff]
        %v663 = vld [vmem:[%s652 + $0x50] sm:$0xff]
        %v664 = vld [vmem:[%s652 + $0x58] sm:$0xff]
        %v665 = vld [vmem:[%s652 + $0x60] sm:$0xff]
        %v666 = vld [vmem:[%s652 + $0x68] sm:$0xff]
        %v667 = vld [vmem:[%s652 + $0x70] sm:$0xff]
        %v668 = vld [vmem:[%s652 + $0x78] sm:$0xff]
        %s669 = scalar_lea.vmem %s7, %s34
        %v670 = vld [vmem:[%s669] sm:$0x1]
        %v672 = vlaneseq
        %v673 = vshrl.u32 %v672, 7
        %v674 = vsub.s32 0, %v673
        %v675 = vrot.slane %v670, %v674
        %677 = vmatprep.subr.mxu0 0.0
        %678 = vmatpush1.msra.mxu0 %v668
        %679 = vmatprep.subr.mxu0 0.0
        %680 = vmatpush1.msra.mxu0 %v667
        %681 = vmatprep.subr.mxu0 0.0
        %682 = vmatpush1.msra.mxu0 %v666
        %683 = vmatprep.subr.mxu0 0.0
        %684 = vmatpush1.msra.mxu0 %v665
        %685 = vmatprep.subr.mxu0 0.0
        %686 = vmatpush1.msra.mxu0 %v664
        %687 = vmatprep.subr.mxu0 0.0
        %688 = vmatpush1.msra.mxu0 %v663
        %689 = vmatprep.subr.mxu0 0.0
        %690 = vmatpush1.msra.mxu0 %v662
        %691 = vmatprep.subr.mxu0 0.0
        %692 = vmatpush1.msra.mxu0 %v661
        %693 = vmatprep.subr.mxu0 0.0
        %694 = vmatpush1.msra.mxu0 %v660
        %695 = vmatprep.subr.mxu0 0.0
        %696 = vmatpush1.msra.mxu0 %v659
        %697 = vmatprep.subr.mxu0 0.0
        %698 = vmatpush1.msra.mxu0 %v658
        %699 = vmatprep.subr.mxu0 0.0
        %700 = vmatpush1.msra.mxu0 %v657
        %701 = vmatprep.subr.mxu0 0.0
        %702 = vmatpush1.msra.mxu0 %v656
        %703 = vmatprep.subr.mxu0 0.0
        %704 = vmatpush1.msra.mxu0 %v655
        %705 = vmatprep.subr.mxu0 0.0
        %706 = vmatpush1.msra.mxu0 %v654
        %707 = vmatprep.subr.mxu0 0.0
        %708 = vmatpush1.msra.mxu0 %v653
        %709 = vmatprep.subr.mxu0 0.0
        %710 = vmatpush2.msra.mxu0 0.0
        %711 = vmatprep.subr.mxu0 0.0
        %712 = vmatpush2.msra.mxu0 0.0
        %713 = vmatprep.subr.mxu0 0.0
        %714 = vmatpush2.msra.mxu0 0.0
        %715 = vmatprep.subr.mxu0 0.0
        %716 = vmatpush2.msra.mxu0 0.0
        %717 = vmatprep.subr.mxu0 0.0
        %718 = vmatpush2.msra.mxu0 0.0
        %719 = vmatprep.subr.mxu0 0.0
        %720 = vmatpush2.msra.mxu0 0.0
        %721 = vmatprep.subr.mxu0 0.0
        %722 = vmatpush2.msra.mxu0 0.0
        %723 = vmatprep.subr.mxu0 0.0
        %724 = vmatpush2.msra.mxu0 0.0
        %725 = vmatprep.subr.mxu0 0.0
        %726 = vmatpush2.msra.mxu0 0.0
        %727 = vmatprep.subr.mxu0 0.0
        %728 = vmatpush2.msra.mxu0 0.0
        %729 = vmatprep.subr.mxu0 0.0
        %730 = vmatpush2.msra.mxu0 0.0
        %731 = vmatprep.subr.mxu0 0.0
        %732 = vmatpush2.msra.mxu0 0.0
        %733 = vmatprep.subr.mxu0 0.0
        %734 = vmatpush2.msra.mxu0 0.0
        %735 = vmatprep.subr.mxu0 0.0
        %736 = vmatpush2.msra.mxu0 0.0
        %737 = vmatprep.subr.mxu0 0.0
        %738 = vmatpush2.msra.mxu0 0.0
        %739 = vmatprep.subr.mxu0 0.0
        %740 = vmatpush2.msra.mxu0 0.0
        %741 = vmatprep.mubr.f32.mxu0 0.0
        %742 = vmatmul.mubr.f32.gmra.mxu0 %v553
        %v743 = vpop.f32.mrf.mxu0
        %v744 = vadd.f32 %v675, %v743
        %v745 = vpop.f32.mrf.mxu0
        %746 = vmatprep.mubr.f32.mxu0 0.0
        %747 = vmatmul.mubr.f32.gmra.mxu0 %v554
        %v748 = vpop.f32.mrf.mxu0
        %v749 = vadd.f32 %v675, %v748
        %v750 = vpop.f32.mrf.mxu0
        %751 = vdwg.mxu0
        %s752 = scalar_lea.vmem %s5, %s555
        %v753 = vld [vmem:[%s752] sm:$0xff]
        %v754 = vld [vmem:[%s752 + $0x8] sm:$0xff]
        %v755 = vld [vmem:[%s752 + $0x10] sm:$0xff]
        %v756 = vld [vmem:[%s752 + $0x18] sm:$0xff]
        %v757 = vld [vmem:[%s752 + $0x20] sm:$0xff]
        %v758 = vld [vmem:[%s752 + $0x28] sm:$0xff]
        %v759 = vld [vmem:[%s752 + $0x30] sm:$0xff]
        %v760 = vld [vmem:[%s752 + $0x38] sm:$0xff]
        %v761 = vld [vmem:[%s752 + $0x40] sm:$0xff]
        %v762 = vld [vmem:[%s752 + $0x48] sm:$0xff]
        %v763 = vld [vmem:[%s752 + $0x50] sm:$0xff]
        %v764 = vld [vmem:[%s752 + $0x58] sm:$0xff]
        %v765 = vld [vmem:[%s752 + $0x60] sm:$0xff]
        %v766 = vld [vmem:[%s752 + $0x68] sm:$0xff]
        %v767 = vld [vmem:[%s752 + $0x70] sm:$0xff]
        %v768 = vld [vmem:[%s752 + $0x78] sm:$0xff]
        %s769 = scalar_lea.vmem %s8, %s34
        %v770 = vld [vmem:[%s769] sm:$0x1]
        %v772 = vlaneseq
        %v773 = vshrl.u32 %v772, 7
        %v774 = vsub.s32 0, %v773
        %v775 = vrot.slane %v770, %v774
        %777 = vmatprep.subr.mxu0 0.0
        %778 = vmatpush1.msra.mxu0 %v768
        %779 = vmatprep.subr.mxu0 0.0
        %780 = vmatpush1.msra.mxu0 %v767
        %781 = vmatprep.subr.mxu0 0.0
        %782 = vmatpush1.msra.mxu0 %v766
        %783 = vmatprep.subr.mxu0 0.0
        %784 = vmatpush1.msra.mxu0 %v765
        %785 = vmatprep.subr.mxu0 0.0
        %786 = vmatpush1.msra.mxu0 %v764
        %787 = vmatprep.subr.mxu0 0.0
        %788 = vmatpush1.msra.mxu0 %v763
        %789 = vmatprep.subr.mxu0 0.0
        %790 = vmatpush1.msra.mxu0 %v762
        %791 = vmatprep.subr.mxu0 0.0
        %792 = vmatpush1.msra.mxu0 %v761
        %793 = vmatprep.subr.mxu0 0.0
        %794 = vmatpush1.msra.mxu0 %v760
        %795 = vmatprep.subr.mxu0 0.0
        %796 = vmatpush1.msra.mxu0 %v759
        %797 = vmatprep.subr.mxu0 0.0
        %798 = vmatpush1.msra.mxu0 %v758
        %799 = vmatprep.subr.mxu0 0.0
        %800 = vmatpush1.msra.mxu0 %v757
        %801 = vmatprep.subr.mxu0 0.0
        %802 = vmatpush1.msra.mxu0 %v756
        %803 = vmatprep.subr.mxu0 0.0
        %804 = vmatpush1.msra.mxu0 %v755
        %805 = vmatprep.subr.mxu0 0.0
        %806 = vmatpush1.msra.mxu0 %v754
        %807 = vmatprep.subr.mxu0 0.0
        %808 = vmatpush1.msra.mxu0 %v753
        %809 = vmatprep.subr.mxu0 0.0
        %810 = vmatpush2.msra.mxu0 0.0
        %811 = vmatprep.subr.mxu0 0.0
        %812 = vmatpush2.msra.mxu0 0.0
        %813 = vmatprep.subr.mxu0 0.0
        %814 = vmatpush2.msra.mxu0 0.0
        %815 = vmatprep.subr.mxu0 0.0
        %816 = vmatpush2.msra.mxu0 0.0
        %817 = vmatprep.subr.mxu0 0.0
        %818 = vmatpush2.msra.mxu0 0.0
        %819 = vmatprep.subr.mxu0 0.0
        %820 = vmatpush2.msra.mxu0 0.0
        %821 = vmatprep.subr.mxu0 0.0
        %822 = vmatpush2.msra.mxu0 0.0
        %823 = vmatprep.subr.mxu0 0.0
        %824 = vmatpush2.msra.mxu0 0.0
        %825 = vmatprep.subr.mxu0 0.0
        %826 = vmatpush2.msra.mxu0 0.0
        %827 = vmatprep.subr.mxu0 0.0
        %828 = vmatpush2.msra.mxu0 0.0
        %829 = vmatprep.subr.mxu0 0.0
        %830 = vmatpush2.msra.mxu0 0.0
        %831 = vmatprep.subr.mxu0 0.0
        %832 = vmatpush2.msra.mxu0 0.0
        %833 = vmatprep.subr.mxu0 0.0
        %834 = vmatpush2.msra.mxu0 0.0
        %835 = vmatprep.subr.mxu0 0.0
        %836 = vmatpush2.msra.mxu0 0.0
        %837 = vmatprep.subr.mxu0 0.0
        %838 = vmatpush2.msra.mxu0 0.0
        %839 = vmatprep.subr.mxu0 0.0
        %840 = vmatpush2.msra.mxu0 0.0
        %841 = vmatprep.mubr.f32.mxu0 0.0
        %842 = vmatmul.mubr.f32.gmra.mxu0 %v553
        %v843 = vpop.f32.mrf.mxu0
        %v844 = vadd.f32 %v775, %v843
        %v845 = vpop.f32.mrf.mxu0
        %846 = vmatprep.mubr.f32.mxu0 0.0
        %847 = vmatmul.mubr.f32.gmra.mxu0 %v554
        %v848 = vpop.f32.mrf.mxu0
        %v849 = vadd.f32 %v775, %v848
        %v850 = vpop.f32.mrf.mxu0
        %851 = vdwg.mxu0
        %v852 = vld [vmem:[%s546] sm:$0xff]
        %vm853 = vcmask 261120
        %v855 = vsel %vm853, %v651, 0
        %v858 = vsel %vm853, %v744, 0
        %v861 = vsel %vm853, %v749, 0
        %863 = vmatprep.subr.mxu0 0.0
        %864 = vmatpush1.xpose.msra.mxu0 0.0
        %865 = vmatprep.subr.mxu0 0.0
        %866 = vmatpush1.xpose.msra.mxu0 0.0
        %867 = vmatprep.subr.mxu0 0.0
        %868 = vmatpush1.xpose.msra.mxu0 0.0
        %869 = vmatprep.subr.mxu0 0.0
        %870 = vmatpush1.xpose.msra.mxu0 0.0
        %871 = vmatprep.subr.mxu0 0.0
        %872 = vmatpush1.xpose.msra.mxu0 0.0
        %873 = vmatprep.subr.mxu0 0.0
        %874 = vmatpush1.xpose.msra.mxu0 0.0
        %875 = vmatprep.subr.mxu0 0.0
        %876 = vmatpush1.xpose.msra.mxu0 0.0
        %877 = vmatprep.subr.mxu0 0.0
        %878 = vmatpush1.xpose.msra.mxu0 0.0
        %879 = vmatprep.subr.mxu0 0.0
        %880 = vmatpush1.xpose.msra.mxu0 0.0
        %881 = vmatprep.subr.mxu0 0.0
        %882 = vmatpush1.xpose.msra.mxu0 0.0
        %883 = vmatprep.subr.mxu0 0.0
        %884 = vmatpush1.xpose.msra.mxu0 0.0
        %885 = vmatprep.subr.mxu0 0.0
        %886 = vmatpush1.xpose.msra.mxu0 0.0
        %887 = vmatprep.subr.mxu0 0.0
        %888 = vmatpush1.xpose.msra.mxu0 0.0
        %889 = vmatprep.subr.mxu0 0.0
        %890 = vmatpush1.xpose.msra.mxu0 0.0
        %891 = vmatprep.subr.mxu0 0.0
        %892 = vmatpush1.xpose.msra.mxu0 %v861
        %893 = vmatprep.subr.mxu0 0.0
        %894 = vmatpush1.xpose.msra.mxu0 %v858
        %895 = vmatprep.subr.mxu0 0.0
        %896 = vmatpush2.xpose.msra.mxu0 0.0
        %897 = vmatprep.subr.mxu0 0.0
        %898 = vmatpush2.xpose.msra.mxu0 0.0
        %899 = vmatprep.subr.mxu0 0.0
        %900 = vmatpush2.xpose.msra.mxu0 0.0
        %901 = vmatprep.subr.mxu0 0.0
        %902 = vmatpush2.xpose.msra.mxu0 0.0
        %903 = vmatprep.subr.mxu0 0.0
        %904 = vmatpush2.xpose.msra.mxu0 0.0
        %905 = vmatprep.subr.mxu0 0.0
        %906 = vmatpush2.xpose.msra.mxu0 0.0
        %907 = vmatprep.subr.mxu0 0.0
        %908 = vmatpush2.xpose.msra.mxu0 0.0
        %909 = vmatprep.subr.mxu0 0.0
        %910 = vmatpush2.xpose.msra.mxu0 0.0
        %911 = vmatprep.subr.mxu0 0.0
        %912 = vmatpush2.xpose.msra.mxu0 0.0
        %913 = vmatprep.subr.mxu0 0.0
        %914 = vmatpush2.xpose.msra.mxu0 0.0
        %915 = vmatprep.subr.mxu0 0.0
        %916 = vmatpush2.xpose.msra.mxu0 0.0
        %917 = vmatprep.subr.mxu0 0.0
        %918 = vmatpush2.xpose.msra.mxu0 0.0
        %919 = vmatprep.subr.mxu0 0.0
        %920 = vmatpush2.xpose.msra.mxu0 0.0
        %921 = vmatprep.subr.mxu0 0.0
        %922 = vmatpush2.xpose.msra.mxu0 0.0
        %923 = vmatprep.subr.mxu0 0.0
        %924 = vmatpush2.xpose.msra.mxu0 0.0
        %925 = vmatprep.subr.mxu0 0.0
        %926 = vmatpush2.xpose.msra.mxu0 0.0
        %927 = vmatprep.mubr.f32.mxu0 0.0
        %928 = vmatmul.mubr.f32.gmra.mxu0 %v855
        %v929 = vpop.f32.mrf.mxu0
        %v930 = vadd.f32 %v852, %v929
        %v931 = vpop.f32.mrf.mxu0
        %932 = vdwg.mxu0
        %vm933 = vcmask 130048
        %v934 = vsel %vm933, %v930, -inf
        %935 = vmax.xlane.f32.xlu0 %v934
        %v936 = vpop.xlane.xlu0 %935
        %v937 = vsub.f32 %v930, %v936
        %v938 = vmul.f32 %v937, 1.442695
        %v939 = vpow.pop %v938
        %v940 = vsel %vm933, %v939, 0.0
        %941 = vadd.xlane.f32.xlu0 %v940
        %v942 = vpop.xlane.xlu0 %941
        %v943 = vrcp.pop %v942
        %v944 = vmul.f32 %v939, %v943
        %v946 = vsel %vm933, %v944, 0
        %948 = vmatprep.subr.mxu0 0.0
        %949 = vmatpush1.msra.mxu0 0.0
        %950 = vmatprep.subr.mxu0 0.0
        %951 = vmatpush1.msra.mxu0 0.0
        %952 = vmatprep.subr.mxu0 0.0
        %953 = vmatpush1.msra.mxu0 0.0
        %954 = vmatprep.subr.mxu0 0.0
        %955 = vmatpush1.msra.mxu0 0.0
        %956 = vmatprep.subr.mxu0 0.0
        %957 = vmatpush1.msra.mxu0 0.0
        %958 = vmatprep.subr.mxu0 0.0
        %959 = vmatpush1.msra.mxu0 0.0
        %960 = vmatprep.subr.mxu0 0.0
        %961 = vmatpush1.msra.mxu0 0.0
        %962 = vmatprep.subr.mxu0 0.0
        %963 = vmatpush1.msra.mxu0 0.0
        %964 = vmatprep.subr.mxu0 0.0
        %965 = vmatpush1.msra.mxu0 0.0
        %966 = vmatprep.subr.mxu0 0.0
        %967 = vmatpush1.msra.mxu0 0.0
        %968 = vmatprep.subr.mxu0 0.0
        %969 = vmatpush1.msra.mxu0 0.0
        %970 = vmatprep.subr.mxu0 0.0
        %971 = vmatpush1.msra.mxu0 0.0
        %972 = vmatprep.subr.mxu0 0.0
        %973 = vmatpush1.msra.mxu0 0.0
        %974 = vmatprep.subr.mxu0 0.0
        %975 = vmatpush1.msra.mxu0 0.0
        %976 = vmatprep.subr.mxu0 0.0
        %977 = vmatpush1.msra.mxu0 %v849
        %978 = vmatprep.subr.mxu0 0.0
        %979 = vmatpush1.msra.mxu0 %v844
        %980 = vmatprep.subr.mxu0 0.0
        %981 = vmatpush2.msra.mxu0 0.0
        %982 = vmatprep.subr.mxu0 0.0
        %983 = vmatpush2.msra.mxu0 0.0
        %984 = vmatprep.subr.mxu0 0.0
        %985 = vmatpush2.msra.mxu0 0.0
        %986 = vmatprep.subr.mxu0 0.0
        %987 = vmatpush2.msra.mxu0 0.0
        %988 = vmatprep.subr.mxu0 0.0
        %989 = vmatpush2.msra.mxu0 0.0
        %990 = vmatprep.subr.mxu0 0.0
        %991 = vmatpush2.msra.mxu0 0.0
        %992 = vmatprep.subr.mxu0 0.0
        %993 = vmatpush2.msra.mxu0 0.0
        %994 = vmatprep.subr.mxu0 0.0
        %995 = vmatpush2.msra.mxu0 0.0
        %996 = vmatprep.subr.mxu0 0.0
        %997 = vmatpush2.msra.mxu0 0.0
        %998 = vmatprep.subr.mxu0 0.0
        %999 = vmatpush2.msra.mxu0 0.0
        %1000 = vmatprep.subr.mxu0 0.0
        %1001 = vmatpush2.msra.mxu0 0.0
        %1002 = vmatprep.subr.mxu0 0.0
        %1003 = vmatpush2.msra.mxu0 0.0
        %1004 = vmatprep.subr.mxu0 0.0
        %1005 = vmatpush2.msra.mxu0 0.0
        %1006 = vmatprep.subr.mxu0 0.0
        %1007 = vmatpush2.msra.mxu0 0.0
        %1008 = vmatprep.subr.mxu0 0.0
        %1009 = vmatpush2.msra.mxu0 0.0
        %1010 = vmatprep.subr.mxu0 0.0
        %1011 = vmatpush2.msra.mxu0 0.0
        %1012 = vmatprep.mubr.f32.mxu0 0.0
        %1013 = vmatmul.mubr.f32.gmra.mxu0 %v946
        %v1014 = vpop.f32.mrf.mxu0
        %v1015 = vadd.f32 0.0, %v1014
        %v1016 = vpop.f32.mrf.mxu0
        %1017 = vdwg.mxu0
        %v1018 = vld [vmem:[#allocation2] sm:$0xff]
        %s1019 = smul.u32 %s34, 32
        %s1020 = scalar_lea.vmem %s9, %s1019
        %v1021 = vld [vmem:[%s1020] sm:$0xff]
        %v1022 = vld [vmem:[%s1020 + $0x8] sm:$0xff]
        %v1023 = vld [vmem:[%s1020 + $0x10] sm:$0xff]
        %v1024 = vld [vmem:[%s1020 + $0x18] sm:$0xff]
        %v1026 = vsel %vm853, %v1015, 0
        %1028 = vmatprep.subr.mxu0 0.0
        %1029 = vmatpush1.msra.mxu0 0.0
        %1030 = vmatprep.subr.mxu0 0.0
        %1031 = vmatpush1.msra.mxu0 0.0
        %1032 = vmatprep.subr.mxu0 0.0
        %1033 = vmatpush1.msra.mxu0 0.0
        %1034 = vmatprep.subr.mxu0 0.0
        %1035 = vmatpush1.msra.mxu0 0.0
        %1036 = vmatprep.subr.mxu0 0.0
        %1037 = vmatpush1.msra.mxu0 0.0
        %1038 = vmatprep.subr.mxu0 0.0
        %1039 = vmatpush1.msra.mxu0 0.0
        %1040 = vmatprep.subr.mxu0 0.0
        %1041 = vmatpush1.msra.mxu0 0.0
        %1042 = vmatprep.subr.mxu0 0.0
        %1043 = vmatpush1.msra.mxu0 0.0
        %1044 = vmatprep.subr.mxu0 0.0
        %1045 = vmatpush1.msra.mxu0 0.0
        %1046 = vmatprep.subr.mxu0 0.0
        %1047 = vmatpush1.msra.mxu0 0.0
        %1048 = vmatprep.subr.mxu0 0.0
        %1049 = vmatpush1.msra.mxu0 0.0
        %1050 = vmatprep.subr.mxu0 0.0
        %1051 = vmatpush1.msra.mxu0 0.0
        %1052 = vmatprep.subr.mxu0 0.0
        %1053 = vmatpush1.msra.mxu0 %v1024
        %1054 = vmatprep.subr.mxu0 0.0
        %1055 = vmatpush1.msra.mxu0 %v1023
        %1056 = vmatprep.subr.mxu0 0.0
        %1057 = vmatpush1.msra.mxu0 %v1022
        %1058 = vmatprep.subr.mxu0 0.0
        %1059 = vmatpush1.msra.mxu0 %v1021
        %1060 = vmatprep.subr.mxu0 0.0
        %1061 = vmatpush2.msra.mxu0 0.0
        %1062 = vmatprep.subr.mxu0 0.0
        %1063 = vmatpush2.msra.mxu0 0.0
        %1064 = vmatprep.subr.mxu0 0.0
        %1065 = vmatpush2.msra.mxu0 0.0
        %1066 = vmatprep.subr.mxu0 0.0
        %1067 = vmatpush2.msra.mxu0 0.0
        %1068 = vmatprep.subr.mxu0 0.0
        %1069 = vmatpush2.msra.mxu0 0.0
        %1070 = vmatprep.subr.mxu0 0.0
        %1071 = vmatpush2.msra.mxu0 0.0
        %1072 = vmatprep.subr.mxu0 0.0
        %1073 = vmatpush2.msra.mxu0 0.0
        %1074 = vmatprep.subr.mxu0 0.0
        %1075 = vmatpush2.msra.mxu0 0.0
        %1076 = vmatprep.subr.mxu0 0.0
        %1077 = vmatpush2.msra.mxu0 0.0
        %1078 = vmatprep.subr.mxu0 0.0
        %1079 = vmatpush2.msra.mxu0 0.0
        %1080 = vmatprep.subr.mxu0 0.0
        %1081 = vmatpush2.msra.mxu0 0.0
        %1082 = vmatprep.subr.mxu0 0.0
        %1083 = vmatpush2.msra.mxu0 0.0
        %1084 = vmatprep.subr.mxu0 0.0
        %1085 = vmatpush2.msra.mxu0 0.0
        %1086 = vmatprep.subr.mxu0 0.0
        %1087 = vmatpush2.msra.mxu0 0.0
        %1088 = vmatprep.subr.mxu0 0.0
        %1089 = vmatpush2.msra.mxu0 0.0
        %1090 = vmatprep.subr.mxu0 0.0
        %1091 = vmatpush2.msra.mxu0 0.0
        %1092 = vmatprep.mubr.f32.mxu0 0.0
        %1093 = vmatmul.mubr.f32.gmra.mxu0 %v1026
        %v1094 = vpop.f32.mrf.mxu0
        %v1095 = vadd.f32 0.0, %v1094
        %v1096 = vpop.f32.mrf.mxu0
        %1097 = vdwg.mxu0
        %v1098 = vadd.f32 %v1018, %v1095
        %1099 = vst [vmem:[#allocation2] sm:$0xff] %v1098
        %p1100 = scmp.eq.s32.totalorder %s34, 3
        // Predicated region
        $region115: #{tpu_custom_call.1} parent=105 // pred_check
          %p1101 = pneg %p1100
        $region116: #{tpu_custom_call.1} parent=105 // pred_check_branch
          %1103 = sbr.rel (%p1101) target = $region118
        $region117: #{tpu_custom_call.1} parent=105 // pred_region
          %v1104 = vld [vmem:[#allocation2] sm:$0xff]
          %v1105 = vld [vmem:[%s10] sm:$0x1]
          %v1107 = vlaneseq
          %v1108 = vshrl.u32 %v1107, 7
          %v1109 = vsub.s32 0, %v1108
          %v1110 = vrot.slane %v1105, %v1109
          %v1112 = vadd.f32 %v1104, %v1110
          %v1113 = vadd.f32 %v552, %v1112
          %v1114 = vld [vmem:[%s11] sm:$0x1]
          %v1115 = vld [vmem:[%s12] sm:$0x1]
          %1116 = vadd.xlane.f32.xlu0 %v1113
          %v1117 = vpop.xlane.xlu0 %1116
          %v1118 = vrcp.pop 128.0
          %v1119 = vmul.f32 %v1117, %v1118
          %v1120 = vsub.f32 %v1113, %v1119
          %v1121 = vmul.f32 %v1120, %v1120
          %1122 = vadd.xlane.f32.xlu0 %v1121
          %v1123 = vpop.xlane.xlu0 %1122
          %v1124 = vmul.f32 %v1123, %v1118
          %v1125 = vadd.f32 %v1124, 1e-05
          %v1126 = vrsqrt.pop %v1125
          %v1127 = vmul.f32 %v1120, %v1126
          %v1129 = vlaneseq
          %v1130 = vshrl.u32 %v1129, 7
          %v1131 = vsub.s32 0, %v1130
          %v1132 = vrot.slane %v1114, %v1131
          %v1134 = vmul.f32 %v1127, %v1132
          %v1136 = vlaneseq
          %v1137 = vshrl.u32 %v1136, 7
          %v1138 = vsub.s32 0, %v1137
          %v1139 = vrot.slane %v1115, %v1138
          %v1141 = vadd.f32 %v1134, %v1139
          %1142 = vst [vmem:[%s534] sm:$0xff] %v1141
        $region118: #{tpu_custom_call.1} parent=105 // pred_fallthru
          _
        %s1143 = sand.u32 %s346, 1
        %s1144 = scalar_lea.sflag [#allocation5], %s1143
        %s1145 = sand.u32 %s346, 1
        %s1146 = smul.addr %s1145, 8
        %s1147 = scalar_lea.vmem [#allocation4], %s1146
        // Predicated region
        $region119: #{tpu_custom_call.1} parent=105 // pred_check
          %p1148 = pneg %p356
        $region120: #{tpu_custom_call.1} parent=105 // pred_check_branch
          %1150 = sbr.rel (%p1148) target = $region122
        $region121: #{tpu_custom_call.1} parent=105 // pred_region
          %s1152 = ssub.s32 128, 128
          %1153 = vsyncadd %s1144, %s1152
          %s1154 = smul.addr %s33, 2
          %s1155 = sadd.s32 %s32, %s1154
          %s1156 = smul.addr %s1155, 128
          %s1157 = scalar_lea.hbm %s13, %s1156
          %s1159 = sshll.u32 %s1147, 4
          %s1160 = int_to_ptr.vmem [resolvable:$true] %s1159
          %1162 = dma.vmem_to_hbm [thread:$0]  %s1160, 128, %s1157, %s1144
        $region122: #{tpu_custom_call.1} parent=105 // pred_fallthru
          _
      $region106: #{tpu_custom_call.1} parent=5 // pred_fallthru
        _
      %p1163 = scmp.le.s32.totalorder 2, %s22
      // Predicated region
      $region123: #{tpu_custom_call.1} parent=5 // pred_check
        %p1164 = pneg %p1163
      $region124: #{tpu_custom_call.1} parent=5 // pred_check_branch
        %1166 = sbr.rel (%p1164) target = $region126
      $region125: #{tpu_custom_call.1} parent=5 // pred_region
        %s1167 = ssub.s32 %s22, 2
        // Predicated region
        $region127: #{tpu_custom_call.1} parent=125 // pred_check
          %p1168 = pneg %p362
        $region128: #{tpu_custom_call.1} parent=125 // pred_check_branch
          %1170 = sbr.rel (%p1168) target = $region130
        $region129: #{tpu_custom_call.1} parent=125 // pred_region
          %s1171 = sand.u32 %s347, 1
          %s1172 = scalar_lea.sflag [#allocation5], %s1171
          %s1173 = sand.u32 %s347, 1
          %s1174 = smul.addr %s1173, 8
          %s1175 = scalar_lea.vmem [#allocation4], %s1174
          %1176 = dma.done %s1172, 128
        $region130: #{tpu_custom_call.1} parent=125 // pred_fallthru
          _
      $region126: #{tpu_custom_call.1} parent=5 // pred_fallthru
        _
    $region6: #{tpu_custom_call.1} parent=1 // loop_footer
      %s26 = sadd.s32 1, %s22
    $region7: #{tpu_custom_call.1} parent=1 // loop_footer_branch
      %21 = sbr.rel target = $region3
    $region8: #{tpu_custom_call.1} parent=1 // loop_exit
      _
    %1177 = vsyncpa [#allocation5], 1
    %s1178 = scalar_lea.sflag [#allocation5], 1
    %1179 = vsyncpa %s1178, 1

</llo_original>
